<compile_context>
chip_gen: v7x
topology: tpu7x:2x2x1
jax: 0.10.0
libtpu: 0.0.40
codegen_flags: <defaults>
</compile_context>

<pallas_src>
import functools

import jax
import jax.numpy as jnp
from jax import lax
from jax.experimental import pallas as pl
from jax.experimental.pallas import tpu as pltpu

LN_EPS = 1e-5
_VMEM_BUDGET = 28 * 1024 * 1024   # target working set (fits v5e/v6e/v7x)
_VMEM_LIMIT = 40 * 1024 * 1024    # explicit scoped-VMEM limit for pallas_call


def _round_up(x, m):
    return ((x + m - 1) // m) * m


def _bias_ln(acc, p_ref, inv_d):
    """conv-bias add + LayerNorm over the true embed dim (f32 math).

    p_ref: packed (8, D_pad) f32 operand; row 0 = conv bias, row 1 = LN gamma,
    row 2 = LN beta.  Padded lanes of all rows are zero, so one-pass sums over
    the padded width equal sums over the real width and padded output columns
    come out as exactly 0.
    """
    y = acc + p_ref[0:1, :]
    s = jnp.sum(y, axis=-1, keepdims=True)
    s2 = jnp.sum(y * y, axis=-1, keepdims=True)
    mean = s * inv_d
    var = jnp.maximum(s2 * inv_d - mean * mean, 0.0)
    r = lax.rsqrt(var + LN_EPS)
    return (y - mean) * (r * p_ref[1:2, :]) + p_ref[2:3, :]


def _proj_ln_kernel(x_ref, w_ref, p_ref, o_ref, *, inv_d):
    # Single-K-step path: the whole flattened weight is VMEM-resident
    # (constant block index), so it is fetched once for the entire grid.
    acc = jnp.dot(x_ref[...], w_ref[...], preferred_element_type=jnp.float32)
    o_ref[...] = _bias_ln(acc, p_ref, inv_d).astype(o_ref.dtype)


def _proj_ln_kernel_ktiled(x_ref, w_ref, p_ref, o_ref, acc_ref, *, inv_d):
    # Fallback for very large K: f32 accumulator resident across the K axis.
    k = pl.program_id(1)

    @pl.when(k == 0)
    def _():
        acc_ref[...] = jnp.zeros_like(acc_ref)

    acc_ref[...] += jnp.dot(x_ref[...], w_ref[...],
                            preferred_element_type=jnp.float32)

    @pl.when(k == pl.num_programs(1) - 1)
    def _():
        o_ref[...] = _bias_ln(acc_ref[...], p_ref, inv_d).astype(o_ref.dtype)


def overlap_patch_embed_3d(x, weight, bias, gamma, beta, *,
                           stride, patch_size, z_block_size,
                           tm=512, tk=512, compute_dtype=jnp.bfloat16,
                           out_dtype=None, vmem_budget=_VMEM_BUDGET):
    """Equivalent of OverlapPatchEmbed3D.forward (flatten=True).

    x:      (B, C_in, T, H, W)         float32
    weight: (D, C_in, kz, kh, kw)      Conv3d weight (PyTorch layout)
    bias:   (D,)                       Conv3d bias
    gamma, beta: (D,)                  LayerNorm affine params
    returns (out, H_out, W_out) with out shape (B, T_out, H_out*W_out, D)
    """
    B, Cin, T, H, W = x.shape
    D, _, kz, kh, kw = weight.shape
    assert kz == z_block_size and kh == patch_size and kw == patch_size
    ph = pw = patch_size // 2
    sh = sw = stride
    T_out = T - kz + 1
    H_out = (H + 2 * ph - kh) // sh + 1
    W_out = (W + 2 * pw - kw) // sw + 1
    out_dtype = x.dtype if out_dtype is None else out_dtype

    N = B * T_out * H_out * W_out
    K = Cin * kz * kh * kw

    # --- host glue: im2col built directly in (N, K) memory order -----------
    # cast -> channels-last -> pad, then stack taps on the LAST axis; the
    # reshape to (N, K) is then a layout no-op.  K order = (Cin major,
    # (z, h, w) minor), matching weight.reshape(D, K).
    xcl = jnp.transpose(x.astype(compute_dtype), (0, 2, 3, 4, 1))   # (B,T,H,W,Cin)
    xp = jnp.pad(xcl, ((0, 0), (0, 0), (ph, ph), (pw, pw), (0, 0)))
    cols = []
    for z in range(kz):
        for i in range(kh):
            for j in range(kw):
                cols.append(xp[:, z:z + T_out,
                               i:i + sh * (H_out - 1) + 1:sh,
                               j:j + sw * (W_out - 1) + 1:sw, :])
    # (B, T_out, H_out, W_out, Cin, kz*kh*kw)
    patches = jnp.stack(cols, axis=-1)
    im2col = patches.reshape(N, K)

    # Flatten the conv weight the same way: (D, Cin, kz, kh, kw) -> (K, D).
    w2d = weight.reshape(D, K).T.astype(compute_dtype)

    # --- tiling / padding ---------------------------------------------------
    D_pad = _round_up(D, 128)                  # lane-dense output stores
    row_granule = 256                          # MXU row granule / bf16 packing
    tm_eff = min(_round_up(tm, row_granule), _round_up(N, row_granule))
    n_pad = _round_up(N, tm_eff)

    cbytes = jnp.dtype(compute_dtype).itemsize
    obytes = jnp.dtype(out_dtype).itemsize

    K_pad = _round_up(K, 128)
    single_k_bytes = (2 * tm_eff * K_pad * cbytes      # x tiles (double-buffered)
                      + 2 * K_pad * D_pad * cbytes     # resident weight (conservative x2)
                      + 2 * tm_eff * D_pad * obytes    # output tiles
                      + 2 * 8 * D_pad * 4)             # packed params
    single_k = single_k_bytes <= vmem_budget

    if not single_k:
        # Fallback: tile K; pad K UP to a multiple of tk (never shrink tk).
        tk_eff = min(_round_up(tk, 128), K_pad)
        K_pad = _round_up(K, tk_eff)

    # bias / gamma / beta packed into one (8, D_pad) f32 operand (rows 0..2).
    params = jnp.zeros((8, D_pad), jnp.float32)
    params = params.at[0, :D].set(bias.astype(jnp.float32))
    params = params.at[1, :D].set(gamma.astype(jnp.float32))
    params = params.at[2, :D].set(beta.astype(jnp.float32))

    im2col_p = jnp.pad(im2col, ((0, n_pad - N), (0, K_pad - K)))
    w2d_p = jnp.pad(w2d, ((0, K_pad - K), (0, D_pad - D)))

    if single_k:
        out = pl.pallas_call(
            functools.partial(_proj_ln_kernel, inv_d=1.0 / D),
            out_shape=jax.ShapeDtypeStruct((n_pad, D_pad), out_dtype),
            grid_spec=pltpu.PrefetchScalarGridSpec(
                num_scalar_prefetch=0,
                grid=(n_pad // tm_eff,),
                in_specs=[
                    pl.BlockSpec((tm_eff, K_pad), lambda i: (i, 0)),
                    pl.BlockSpec((K_pad, D_pad), lambda i: (0, 0)),   # VMEM-resident
                    pl.BlockSpec((8, D_pad), lambda i: (0, 0)),       # VMEM-resident
                ],
                out_specs=pl.BlockSpec((tm_eff, D_pad), lambda i: (i, 0)),
            ),
            compiler_params=pltpu.CompilerParams(
                dimension_semantics=("parallel",),
                vmem_limit_bytes=_VMEM_LIMIT),
        )(im2col_p, w2d_p, params)
    else:
        out = pl.pallas_call(
            functools.partial(_proj_ln_kernel_ktiled, inv_d=1.0 / D),
            out_shape=jax.ShapeDtypeStruct((n_pad, D_pad), out_dtype),
            grid_spec=pltpu.PrefetchScalarGridSpec(
                num_scalar_prefetch=0,
                grid=(n_pad // tm_eff, K_pad // tk_eff),
                in_specs=[
                    pl.BlockSpec((tm_eff, tk_eff), lambda i, k: (i, k)),
                    pl.BlockSpec((tk_eff, D_pad), lambda i, k: (k, 0)),
                    pl.BlockSpec((8, D_pad), lambda i, k: (0, 0)),
                ],
                out_specs=pl.BlockSpec((tm_eff, D_pad), lambda i, k: (i, 0)),
                scratch_shapes=[pltpu.VMEM((tm_eff, D_pad), jnp.float32)],
            ),
            compiler_params=pltpu.CompilerParams(
                dimension_semantics=("parallel", "arbitrary"),
                vmem_limit_bytes=_VMEM_LIMIT),
        )(im2col_p, w2d_p, params)

    out = out[:N, :D].reshape(B, T_out, H_out * W_out, D)
    return out, H_out, W_out


def _reference(x, weight, bias, gamma, beta, *, stride, patch_size):
    """Pure-JAX f32 reference matching the PyTorch forward."""
    ph = patch_size // 2
    y = lax.conv_general_dilated(
        x, weight, window_strides=(1, stride, stride),
        padding=((0, 0), (ph, ph), (ph, ph)),
        dimension_numbers=("NCDHW", "OIDHW", "NCDHW"))
    y = y + bias[None, :, None, None, None]
    B, C, T, H, W = y.shape
    # flatten(3).transpose(1,2).transpose(2,3) -> (B, T, H*W, C)
    y = y.reshape(B, C, T, H * W).transpose(0, 2, 3, 1)
    mean = y.mean(-1, keepdims=True)
    var = ((y - mean) ** 2).mean(-1, keepdims=True)
    y = (y - mean) / jnp.sqrt(var + LN_EPS) * gamma + beta
    return y, H, W


if __name__ == "__main__":
    # Small shapes consistent with the module's constructor signature.
    B, Cin, T = 2, 4, 3
    img_size = 16
    stride, patch_size, z_block_size = 4, 8, 2
    embed_dim = 32

    key = jax.random.PRNGKey(0)
    kx, kw_, kb = jax.random.split(key, 3)

    x = jax.random.normal(kx, (B, Cin, T, img_size, img_size), jnp.float32)
    fan_in = Cin * z_block_size * patch_size * patch_size
    weight = jax.random.normal(
        kw_, (embed_dim, Cin, z_block_size, patch_size, patch_size),
        jnp.float32) * (1.0 / jnp.sqrt(fan_in))
    bias = jax.random.normal(kb, (embed_dim,), jnp.float32) * 0.02
    gamma = jnp.ones((embed_dim,), jnp.float32)   # LayerNorm default init
    beta = jnp.zeros((embed_dim,), jnp.float32)

    ref, H_ref, W_ref = _reference(
        x, weight, bias, gamma, beta, stride=stride, patch_size=patch_size)

    # 1) f32 compute, single-K (weight-resident) path: tight tolerance.
    out32, H_out, W_out = overlap_patch_embed_3d(
        x, weight, bias, gamma, beta,
        stride=stride, patch_size=patch_size, z_block_size=z_block_size,
        compute_dtype=jnp.float32)
    out32 = jax.block_until_ready(out32)
    assert (H_out, W_out) == (H_ref, W_ref)
    assert out32.shape == ref.shape, (out32.shape, ref.shape)
    assert jnp.allclose(out32, ref, atol=1e-4, rtol=1e-4), \
        float(jnp.max(jnp.abs(out32 - ref)))

    # 2) f32 compute, forced tiled-K fallback (vmem_budget=0, tk=128):
    #    exercises the accumulator / pl.when path with 4 K steps.
    outkt, _, _ = overlap_patch_embed_3d(
        x, weight, bias, gamma, beta,
        stride=stride, patch_size=patch_size, z_block_size=z_block_size,
        compute_dtype=jnp.float32, tk=128, vmem_budget=0)
    outkt = jax.block_until_ready(outkt)
    assert jnp.allclose(outkt, ref, atol=1e-4, rtol=1e-4), \
        float(jnp.max(jnp.abs(outkt - ref)))

    # 3) Default bf16 MXU path: relaxed tolerance (bf16 operands; accumulation
    #    and LayerNorm stay f32 inside the kernel).
    outbf, _, _ = overlap_patch_embed_3d(
        x, weight, bias, gamma, beta,
        stride=stride, patch_size=patch_size, z_block_size=z_block_size)
    outbf = jax.block_until_ready(outbf)
    assert outbf.shape == ref.shape
    assert jnp.allclose(outbf, ref, atol=5e-2, rtol=5e-2), \
        float(jnp.max(jnp.abs(outbf - ref)))

    print("KERNEL_OK")
</pallas_src>

<mosaic_0001>
module attributes {stable_mosaic.version = 11 : i64} {
  func.func @_proj_ln_kernel(%arg0: i32, %arg1: memref<256x512xf32, #tpu.memory_space<vmem>>, %arg2: memref<512x128xf32, #tpu.memory_space<vmem>>, %arg3: memref<8x128xf32, #tpu.memory_space<vmem>>, %arg4: memref<256x128xf32, #tpu.memory_space<vmem>>) attributes {dimension_semantics = [#tpu.dimension_semantics<parallel>], iteration_bounds = array<i64: 1>, scalar_prefetch = 0 : i64, scratch_operands = 0 : i64, tpu.core_type = #tpu.core_type<tc>, window_params = [{transform_indices = @transform_0, window_bounds = array<i64: 256, 512>}, {pipeline_mode = #tpu.pipeline_mode<synchronous>, transform_indices = @transform_1, window_bounds = array<i64: 512, 128>}, {pipeline_mode = #tpu.pipeline_mode<synchronous>, transform_indices = @transform_2, window_bounds = array<i64: 8, 128>}, {transform_indices = @transform_3, window_bounds = array<i64: 256, 128>}]} {
    %c0 = arith.constant 0 : index
    %c0_0 = arith.constant 0 : index
    %0 = vector.load %arg1[%c0, %c0_0] : memref<256x512xf32, #tpu.memory_space<vmem>>, vector<256x512xf32>
    %c0_1 = arith.constant 0 : index
    %c0_2 = arith.constant 0 : index
    %1 = vector.load %arg2[%c0_1, %c0_2] : memref<512x128xf32, #tpu.memory_space<vmem>>, vector<512x128xf32>
    %cst = arith.constant dense<0.000000e+00> : vector<256x128xf32>
    %2 = tpu.matmul %0, %1, %cst {dimension_numbers = #tpu.dot_dimension_numbers<[1], [0], [0], [1], [0, 0, 1, 1], [], []>} : vector<256x512xf32>, vector<512x128xf32>, vector<256x128xf32> -> vector<256x128xf32>
    %c0_3 = arith.constant 0 : index
    %c0_4 = arith.constant 0 : index
    %3 = vector.load %arg3[%c0_3, %c0_4] : memref<8x128xf32, #tpu.memory_space<vmem>>, vector<1x128xf32>
    %4 = vector.broadcast %3 : vector<1x128xf32> to vector<256x128xf32>
    %5 = arith.addf %2, %4 : vector<256x128xf32>
    %cst_5 = arith.constant dense<0.000000e+00> : vector<256xf32>
    %6 = vector.multi_reduction <add>, %5, %cst_5 [1] : vector<256x128xf32> to vector<256xf32>
    %7 = vector.shape_cast %6 : vector<256xf32> to vector<256x1xf32>
    %8 = arith.mulf %5, %5 : vector<256x128xf32>
    %cst_6 = arith.constant dense<0.000000e+00> : vector<256xf32>
    %9 = vector.multi_reduction <add>, %8, %cst_6 [1] : vector<256x128xf32> to vector<256xf32>
    %10 = vector.shape_cast %9 : vector<256xf32> to vector<256x1xf32>
    %cst_7 = arith.constant 3.125000e-02 : f32
    %11 = vector.broadcast %cst_7 : f32 to vector<256x1xf32>
    %12 = arith.mulf %7, %11 : vector<256x1xf32>
    %cst_8 = arith.constant 3.125000e-02 : f32
    %13 = vector.broadcast %cst_8 : f32 to vector<256x1xf32>
    %14 = arith.mulf %10, %13 : vector<256x1xf32>
    %15 = arith.mulf %12, %12 : vector<256x1xf32>
    %16 = arith.subf %14, %15 : vector<256x1xf32>
    %cst_9 = arith.constant 0.000000e+00 : f32
    %17 = vector.broadcast %cst_9 : f32 to vector<256x1xf32>
    %18 = arith.maximumf %16, %17 : vector<256x1xf32>
    %cst_10 = arith.constant 9.99999974E-6 : f32
    %19 = vector.broadcast %cst_10 : f32 to vector<256x1xf32>
    %20 = arith.addf %18, %19 : vector<256x1xf32>
    %21 = math.rsqrt %20 : vector<256x1xf32>
    %22 = vector.broadcast %12 : vector<256x1xf32> to vector<256x128xf32>
    %23 = arith.subf %5, %22 : vector<256x128xf32>
    %c1 = arith.constant 1 : index
    %c0_11 = arith.constant 0 : index
    %24 = vector.load %arg3[%c1, %c0_11] : memref<8x128xf32, #tpu.memory_space<vmem>>, vector<1x128xf32>
    %25 = vector.broadcast %21 : vector<256x1xf32> to vector<256x128xf32>
    %26 = vector.broadcast %24 : vector<1x128xf32> to vector<256x128xf32>
    %27 = arith.mulf %25, %26 : vector<256x128xf32>
    %28 = arith.mulf %23, %27 : vector<256x128xf32>
    %c2 = arith.constant 2 : index
    %c0_12 = arith.constant 0 : index
    %29 = vector.load %arg3[%c2, %c0_12] : memref<8x128xf32, #tpu.memory_space<vmem>>, vector<1x128xf32>
    %30 = vector.broadcast %29 : vector<1x128xf32> to vector<256x128xf32>
    %31 = arith.addf %28, %30 : vector<256x128xf32>
    %c0_13 = arith.constant 0 : index
    %c0_14 = arith.constant 0 : index
    %32 = vector.load %arg4[%c0_13, %c0_14] : memref<256x128xf32, #tpu.memory_space<vmem>>, vector<256x128xf32>
    tpu.vector_store %arg4[%c0_13, %c0_14], %31 {strides = array<i32>} : memref<256x128xf32, #tpu.memory_space<vmem>>, vector<256x128xf32>,
    return
  }
  func.func @transform_0(%arg0: i32) -> (i32, i32) {
    %c0_i32 = arith.constant 0 : i32
    %c0_i32_0 = arith.constant 0 : i32
    return %arg0, %c0_i32 : i32, i32
  }
  func.func @transform_1(%arg0: i32) -> (i32, i32) {
    %c0_i32 = arith.constant 0 : i32
    %c0_i32_0 = arith.constant 0 : i32
    %c0_i32_1 = arith.constant 0 : i32
    return %c0_i32, %c0_i32_0 : i32, i32
  }
  func.func @transform_2(%arg0: i32) -> (i32, i32) {
    %c0_i32 = arith.constant 0 : i32
    %c0_i32_0 = arith.constant 0 : i32
    %c0_i32_1 = arith.constant 0 : i32
    return %c0_i32, %c0_i32_0 : i32, i32
  }
  func.func @transform_3(%arg0: i32) -> (i32, i32) {
    %c0_i32 = arith.constant 0 : i32
    %c0_i32_0 = arith.constant 0 : i32
    return %arg0, %c0_i32 : i32, i32
  }
}

</mosaic_0001>

<llo_original>
// kernel: tpu_custom_call.1
$region0: #{tpu_custom_call.1}
  #allocation0 [shape = 'u32[]', space=smem, size = 0x4, offset = 0x4, fixed_abs, tag = 'smem constant byte address 0x4 - core index']
  #allocation1 [shape = 'u32[144,128]{1,0:T(1,128)}', space=vmem, size = 0x12000, scoped, tag = 'internal scratch']
  %s0 = inlined_call_operand.hbm [shape: f32[256,512], index: 0, kind: input, shape index: {}]
  %s1 = inlined_call_operand.hbm [shape: f32[512,128], index: 1, kind: input, shape index: {}]
  %s2 = inlined_call_operand.hbm [shape: f32[8,128], index: 2, kind: input, shape index: {}]
  %s3 = inlined_call_operand.hbm [shape: f32[256,128], index: 3, kind: output, shape index: {}]
  %s4 = sld [smem:[#allocation0]]
  $region34: #{tpu_custom_call.1} parent=0
    _
  %s6 = ssub.s32 1, %s4
  %s7 = scalar_select 0, %s6, %s4
  $region1: #{tpu_custom_call.1} parent=0
    #allocation2 [shape = 'u8[524288]{0}', space=vmem, size = 0x80000, scoped, tag = 'input window, operand 0, single buffered']
    #allocation3 [shape = 's32[1]{0}', space=sflag, size = 0x4, scoped, tag = 'scoped memory for tpu_custom_call.1']
    #allocation4 [shape = 's32[1]{0}', space=sflag, size = 0x4, scoped, tag = 'scoped memory for tpu_custom_call.1']
    #allocation5 [shape = 'u8[262144]{0}', space=vmem, size = 0x40000, scoped, tag = 'input window, operand 1, single buffered']
    #allocation6 [shape = 's32[1]{0}', space=sflag, size = 0x4, scoped, tag = 'scoped memory for tpu_custom_call.1']
    #allocation7 [shape = 'u8[4096]{0}', space=vmem, size = 0x1000, scoped, tag = 'input window, operand 2, single buffered']
    #allocation8 [shape = 'u8[131072]{0}', space=vmem, size = 0x20000, scoped, tag = 'output window, operand 0, single buffered']
    %8 = vsyncpa [#allocation3], 0
    %9 = vsyncpa [#allocation6], 0
    %10 = vsyncpa [#allocation4], 0
    // Predicated region
    $region2: #{tpu_custom_call.1} parent=1 // pred_check
      _
    $region3: #{tpu_custom_call.1} parent=1 // pred_check_branch
      %12 = sbr.rel (0) target = $region5
    $region4: #{tpu_custom_call.1} parent=1 // pred_region
      %s14 = ssub.s32 16384, 16384
      %15 = vsyncadd [#allocation3], %s14
      %s16 = sshll.u32 [#allocation2], 4
      %s17 = int_to_ptr.vmem [resolvable:$true] %s16
      %22 = dma.hbm_to_vmem [thread:$0]  %s0, 16384, %s17, [#allocation3], 512, 512, 32
    $region5: #{tpu_custom_call.1} parent=1 // pred_fallthru
      _
    // Predicated region
    $region6: #{tpu_custom_call.1} parent=1 // pred_check
      _
    $region7: #{tpu_custom_call.1} parent=1 // pred_check_branch
      %24 = sbr.rel (0) target = $region9
    $region8: #{tpu_custom_call.1} parent=1 // pred_region
      %s26 = ssub.s32 8192, 8192
      %27 = vsyncadd [#allocation6], %s26
      %s28 = sshll.u32 [#allocation5], 4
      %s29 = int_to_ptr.vmem [resolvable:$true] %s28
      %34 = dma.hbm_to_vmem [thread:$0]  %s1, 8192, %s29, [#allocation6], 128, 128, 8
    $region9: #{tpu_custom_call.1} parent=1 // pred_fallthru
      _
    // Predicated region
    $region10: #{tpu_custom_call.1} parent=1 // pred_check
      _
    $region11: #{tpu_custom_call.1} parent=1 // pred_check_branch
      %36 = sbr.rel (0) target = $region13
    $region12: #{tpu_custom_call.1} parent=1 // pred_region
      %s38 = ssub.s32 128, 128
      %39 = vsyncadd [#allocation6], %s38
      %s41 = sshll.u32 [#allocation7], 4
      %s42 = int_to_ptr.vmem [resolvable:$true] %s41
      %44 = dma.hbm_to_vmem [thread:$0]  %s2, 128, %s42, [#allocation6]
    $region13: #{tpu_custom_call.1} parent=1 // pred_fallthru
      _
    // Predicated region
    $region14: #{tpu_custom_call.1} parent=1 // pred_check
      _
    $region15: #{tpu_custom_call.1} parent=1 // pred_check_branch
      %46 = sbr.rel (0) target = $region17
    $region16: #{tpu_custom_call.1} parent=1 // pred_region
      %47 = dma.done [#allocation3], 16384
    $region17: #{tpu_custom_call.1} parent=1 // pred_fallthru
      _
    // Predicated region
    $region18: #{tpu_custom_call.1} parent=1 // pred_check
      _
    $region19: #{tpu_custom_call.1} parent=1 // pred_check_branch
      %49 = sbr.rel (0) target = $region21
    $region20: #{tpu_custom_call.1} parent=1 // pred_region
      %50 = dma.done [#allocation6], 8192
    $region21: #{tpu_custom_call.1} parent=1 // pred_fallthru
      _
    // Predicated region
    $region22: #{tpu_custom_call.1} parent=1 // pred_check
      _
    $region23: #{tpu_custom_call.1} parent=1 // pred_check_branch
      %52 = sbr.rel (0) target = $region25
    $region24: #{tpu_custom_call.1} parent=1 // pred_region
      %53 = dma.done [#allocation6], 128
    $region25: #{tpu_custom_call.1} parent=1 // pred_fallthru
      _
    %v54 = vld [vmem:[#allocation2] sm:$0xff]
    %v55 = vld [vmem:[#allocation2 + $0x8] sm:$0xff]
    %v56 = vld [vmem:[#allocation2 + $0x10] sm:$0xff]
    %v57 = vld [vmem:[#allocation2 + $0x18] sm:$0xff]
    %v58 = vld [vmem:[#allocation2 + $0x20] sm:$0xff]
    %v59 = vld [vmem:[#allocation2 + $0x28] sm:$0xff]
    %v60 = vld [vmem:[#allocation2 + $0x30] sm:$0xff]
    %v61 = vld [vmem:[#allocation2 + $0x38] sm:$0xff]
    %v62 = vld [vmem:[#allocation2 + $0x40] sm:$0xff]
    %v63 = vld [vmem:[#allocation2 + $0x48] sm:$0xff]
    %v64 = vld [vmem:[#allocation2 + $0x50] sm:$0xff]
    %v65 = vld [vmem:[#allocation2 + $0x58] sm:$0xff]
    %v66 = vld [vmem:[#allocation2 + $0x60] sm:$0xff]
    %v67 = vld [vmem:[#allocation2 + $0x68] sm:$0xff]
    %v68 = vld [vmem:[#allocation2 + $0x70] sm:$0xff]
    %v69 = vld [vmem:[#allocation2 + $0x78] sm:$0xff]
    %v70 = vld [vmem:[#allocation2 + $0x80] sm:$0xff]
    %v71 = vld [vmem:[#allocation2 + $0x88] sm:$0xff]
    %v72 = vld [vmem:[#allocation2 + $0x90] sm:$0xff]
    %v73 = vld [vmem:[#allocation2 + $0x98] sm:$0xff]
    %v74 = vld [vmem:[#allocation2 + $0xa0] sm:$0xff]
    %v75 = vld [vmem:[#allocation2 + $0xa8] sm:$0xff]
    %v76 = vld [vmem:[#allocation2 + $0xb0] sm:$0xff]
    %v77 = vld [vmem:[#allocation2 + $0xb8] sm:$0xff]
    %v78 = vld [vmem:[#allocation2 + $0xc0] sm:$0xff]
    %v79 = vld [vmem:[#allocation2 + $0xc8] sm:$0xff]
    %v80 = vld [vmem:[#allocation2 + $0xd0] sm:$0xff]
    %v81 = vld [vmem:[#allocation2 + $0xd8] sm:$0xff]
    %v82 = vld [vmem:[#allocation2 + $0xe0] sm:$0xff]
    %v83 = vld [vmem:[#allocation2 + $0xe8] sm:$0xff]
    %v84 = vld [vmem:[#allocation2 + $0xf0] sm:$0xff]
    %v85 = vld [vmem:[#allocation2 + $0xf8] sm:$0xff]
    %v86 = vld [vmem:[#allocation2 + $0x100] sm:$0xff]
    %v87 = vld [vmem:[#allocation2 + $0x108] sm:$0xff]
    %v88 = vld [vmem:[#allocation2 + $0x110] sm:$0xff]
    %v89 = vld [vmem:[#allocation2 + $0x118] sm:$0xff]
    %v90 = vld [vmem:[#allocation2 + $0x120] sm:$0xff]
    %v91 = vld [vmem:[#allocation2 + $0x128] sm:$0xff]
    %v92 = vld [vmem:[#allocation2 + $0x130] sm:$0xff]
    %v93 = vld [vmem:[#allocation2 + $0x138] sm:$0xff]
    %v94 = vld [vmem:[#allocation2 + $0x140] sm:$0xff]
    %v95 = vld [vmem:[#allocation2 + $0x148] sm:$0xff]
    %v96 = vld [vmem:[#allocation2 + $0x150] sm:$0xff]
    %v97 = vld [vmem:[#allocation2 + $0x158] sm:$0xff]
    %v98 = vld [vmem:[#allocation2 + $0x160] sm:$0xff]
    %v99 = vld [vmem:[#allocation2 + $0x168] sm:$0xff]
    %v100 = vld [vmem:[#allocation2 + $0x170] sm:$0xff]
    %v101 = vld [vmem:[#allocation2 + $0x178] sm:$0xff]
    %v102 = vld [vmem:[#allocation2 + $0x180] sm:$0xff]
    %v103 = vld [vmem:[#allocation2 + $0x188] sm:$0xff]
    %v104 = vld [vmem:[#allocation2 + $0x190] sm:$0xff]
    %v105 = vld [vmem:[#allocation2 + $0x198] sm:$0xff]
    %v106 = vld [vmem:[#allocation2 + $0x1a0] sm:$0xff]
    %v107 = vld [vmem:[#allocation2 + $0x1a8] sm:$0xff]
    %v108 = vld [vmem:[#allocation2 + $0x1b0] sm:$0xff]
    %v109 = vld [vmem:[#allocation2 + $0x1b8] sm:$0xff]
    %v110 = vld [vmem:[#allocation2 + $0x1c0] sm:$0xff]
    %v111 = vld [vmem:[#allocation2 + $0x1c8] sm:$0xff]
    %v112 = vld [vmem:[#allocation2 + $0x1d0] sm:$0xff]
    %v113 = vld [vmem:[#allocation2 + $0x1d8] sm:$0xff]
    %v114 = vld [vmem:[#allocation2 + $0x1e0] sm:$0xff]
    %v115 = vld [vmem:[#allocation2 + $0x1e8] sm:$0xff]
    %v116 = vld [vmem:[#allocation2 + $0x1f0] sm:$0xff]
    %v117 = vld [vmem:[#allocation2 + $0x1f8] sm:$0xff]
    %v118 = vld [vmem:[#allocation2 + $0x200] sm:$0xff]
    %v119 = vld [vmem:[#allocation2 + $0x208] sm:$0xff]
    %v120 = vld [vmem:[#allocation2 + $0x210] sm:$0xff]
    %v121 = vld [vmem:[#allocation2 + $0x218] sm:$0xff]
    %v122 = vld [vmem:[#allocation2 + $0x220] sm:$0xff]
    %v123 = vld [vmem:[#allocation2 + $0x228] sm:$0xff]
    %v124 = vld [vmem:[#allocation2 + $0x230] sm:$0xff]
    %v125 = vld [vmem:[#allocation2 + $0x238] sm:$0xff]
    %v126 = vld [vmem:[#allocation2 + $0x240] sm:$0xff]
    %v127 = vld [vmem:[#allocation2 + $0x248] sm:$0xff]
    %v128 = vld [vmem:[#allocation2 + $0x250] sm:$0xff]
    %v129 = vld [vmem:[#allocation2 + $0x258] sm:$0xff]
    %v130 = vld [vmem:[#allocation2 + $0x260] sm:$0xff]
    %v131 = vld [vmem:[#allocation2 + $0x268] sm:$0xff]
    %v132 = vld [vmem:[#allocation2 + $0x270] sm:$0xff]
    %v133 = vld [vmem:[#allocation2 + $0x278] sm:$0xff]
    %v134 = vld [vmem:[#allocation2 + $0x280] sm:$0xff]
    %v135 = vld [vmem:[#allocation2 + $0x288] sm:$0xff]
    %v136 = vld [vmem:[#allocation2 + $0x290] sm:$0xff]
    %v137 = vld [vmem:[#allocation2 + $0x298] sm:$0xff]
    %v138 = vld [vmem:[#allocation2 + $0x2a0] sm:$0xff]
    %v139 = vld [vmem:[#allocation2 + $0x2a8] sm:$0xff]
    %v140 = vld [vmem:[#allocation2 + $0x2b0] sm:$0xff]
    %v141 = vld [vmem:[#allocation2 + $0x2b8] sm:$0xff]
    %v142 = vld [vmem:[#allocation2 + $0x2c0] sm:$0xff]
    %v143 = vld [vmem:[#allocation2 + $0x2c8] sm:$0xff]
    %v144 = vld [vmem:[#allocation2 + $0x2d0] sm:$0xff]
    %v145 = vld [vmem:[#allocation2 + $0x2d8] sm:$0xff]
    %v146 = vld [vmem:[#allocation2 + $0x2e0] sm:$0xff]
    %v147 = vld [vmem:[#allocation2 + $0x2e8] sm:$0xff]
    %v148 = vld [vmem:[#allocation2 + $0x2f0] sm:$0xff]
    %v149 = vld [vmem:[#allocation2 + $0x2f8] sm:$0xff]
    %v150 = vld [vmem:[#allocation2 + $0x300] sm:$0xff]
    %v151 = vld [vmem:[#allocation2 + $0x308] sm:$0xff]
    %v152 = vld [vmem:[#allocation2 + $0x310] sm:$0xff]
    %v153 = vld [vmem:[#allocation2 + $0x318] sm:$0xff]
    %v154 = vld [vmem:[#allocation2 + $0x320] sm:$0xff]
    %v155 = vld [vmem:[#allocation2 + $0x328] sm:$0xff]
    %v156 = vld [vmem:[#allocation2 + $0x330] sm:$0xff]
    %v157 = vld [vmem:[#allocation2 + $0x338] sm:$0xff]
    %v158 = vld [vmem:[#allocation2 + $0x340] sm:$0xff]
    %v159 = vld [vmem:[#allocation2 + $0x348] sm:$0xff]
    %v160 = vld [vmem:[#allocation2 + $0x350] sm:$0xff]
    %v161 = vld [vmem:[#allocation2 + $0x358] sm:$0xff]
    %v162 = vld [vmem:[#allocation2 + $0x360] sm:$0xff]
    %v163 = vld [vmem:[#allocation2 + $0x368] sm:$0xff]
    %v164 = vld [vmem:[#allocation2 + $0x370] sm:$0xff]
    %v165 = vld [vmem:[#allocation2 + $0x378] sm:$0xff]
    %v166 = vld [vmem:[#allocation2 + $0x380] sm:$0xff]
    %v167 = vld [vmem:[#allocation2 + $0x388] sm:$0xff]
    %v168 = vld [vmem:[#allocation2 + $0x390] sm:$0xff]
    %v169 = vld [vmem:[#allocation2 + $0x398] sm:$0xff]
    %v170 = vld [vmem:[#allocation2 + $0x3a0] sm:$0xff]
    %v171 = vld [vmem:[#allocation2 + $0x3a8] sm:$0xff]
    %v172 = vld [vmem:[#allocation2 + $0x3b0] sm:$0xff]
    %v173 = vld [vmem:[#allocation2 + $0x3b8] sm:$0xff]
    %v174 = vld [vmem:[#allocation2 + $0x3c0] sm:$0xff]
    %v175 = vld [vmem:[#allocation2 + $0x3c8] sm:$0xff]
    %v176 = vld [vmem:[#allocation2 + $0x3d0] sm:$0xff]
    %v177 = vld [vmem:[#allocation2 + $0x3d8] sm:$0xff]
    %v178 = vld [vmem:[#allocation2 + $0x3e0] sm:$0xff]
    %v179 = vld [vmem:[#allocation2 + $0x3e8] sm:$0xff]
    %v180 = vld [vmem:[#allocation2 + $0x3f0] sm:$0xff]
    %v181 = vld [vmem:[#allocation2 + $0x3f8] sm:$0xff]
    %v182 = vld [vmem:[#allocation5] sm:$0xff]
    %v183 = vld [vmem:[#allocation5 + $0x8] sm:$0xff]
    %v184 = vld [vmem:[#allocation5 + $0x10] sm:$0xff]
    %v185 = vld [vmem:[#allocation5 + $0x18] sm:$0xff]
    %v186 = vld [vmem:[#allocation5 + $0x20] sm:$0xff]
    %v187 = vld [vmem:[#allocation5 + $0x28] sm:$0xff]
    %v188 = vld [vmem:[#allocation5 + $0x30] sm:$0xff]
    %v189 = vld [vmem:[#allocation5 + $0x38] sm:$0xff]
    %v190 = vld [vmem:[#allocation5 + $0x40] sm:$0xff]
    %v191 = vld [vmem:[#allocation5 + $0x48] sm:$0xff]
    %v192 = vld [vmem:[#allocation5 + $0x50] sm:$0xff]
    %v193 = vld [vmem:[#allocation5 + $0x58] sm:$0xff]
    %v194 = vld [vmem:[#allocation5 + $0x60] sm:$0xff]
    %v195 = vld [vmem:[#allocation5 + $0x68] sm:$0xff]
    %v196 = vld [vmem:[#allocation5 + $0x70] sm:$0xff]
    %v197 = vld [vmem:[#allocation5 + $0x78] sm:$0xff]
    %v198 = vld [vmem:[#allocation5 + $0x80] sm:$0xff]
    %v199 = vld [vmem:[#allocation5 + $0x88] sm:$0xff]
    %v200 = vld [vmem:[#allocation5 + $0x90] sm:$0xff]
    %v201 = vld [vmem:[#allocation5 + $0x98] sm:$0xff]
    %v202 = vld [vmem:[#allocation5 + $0xa0] sm:$0xff]
    %v203 = vld [vmem:[#allocation5 + $0xa8] sm:$0xff]
    %v204 = vld [vmem:[#allocation5 + $0xb0] sm:$0xff]
    %v205 = vld [vmem:[#allocation5 + $0xb8] sm:$0xff]
    %v206 = vld [vmem:[#allocation5 + $0xc0] sm:$0xff]
    %v207 = vld [vmem:[#allocation5 + $0xc8] sm:$0xff]
    %v208 = vld [vmem:[#allocation5 + $0xd0] sm:$0xff]
    %v209 = vld [vmem:[#allocation5 + $0xd8] sm:$0xff]
    %v210 = vld [vmem:[#allocation5 + $0xe0] sm:$0xff]
    %v211 = vld [vmem:[#allocation5 + $0xe8] sm:$0xff]
    %v212 = vld [vmem:[#allocation5 + $0xf0] sm:$0xff]
    %v213 = vld [vmem:[#allocation5 + $0xf8] sm:$0xff]
    %v214 = vld [vmem:[#allocation5 + $0x100] sm:$0xff]
    %v215 = vld [vmem:[#allocation5 + $0x108] sm:$0xff]
    %v216 = vld [vmem:[#allocation5 + $0x110] sm:$0xff]
    %v217 = vld [vmem:[#allocation5 + $0x118] sm:$0xff]
    %v218 = vld [vmem:[#allocation5 + $0x120] sm:$0xff]
    %v219 = vld [vmem:[#allocation5 + $0x128] sm:$0xff]
    %v220 = vld [vmem:[#allocation5 + $0x130] sm:$0xff]
    %v221 = vld [vmem:[#allocation5 + $0x138] sm:$0xff]
    %v222 = vld [vmem:[#allocation5 + $0x140] sm:$0xff]
    %v223 = vld [vmem:[#allocation5 + $0x148] sm:$0xff]
    %v224 = vld [vmem:[#allocation5 + $0x150] sm:$0xff]
    %v225 = vld [vmem:[#allocation5 + $0x158] sm:$0xff]
    %v226 = vld [vmem:[#allocation5 + $0x160] sm:$0xff]
    %v227 = vld [vmem:[#allocation5 + $0x168] sm:$0xff]
    %v228 = vld [vmem:[#allocation5 + $0x170] sm:$0xff]
    %v229 = vld [vmem:[#allocation5 + $0x178] sm:$0xff]
    %v230 = vld [vmem:[#allocation5 + $0x180] sm:$0xff]
    %v231 = vld [vmem:[#allocation5 + $0x188] sm:$0xff]
    %v232 = vld [vmem:[#allocation5 + $0x190] sm:$0xff]
    %v233 = vld [vmem:[#allocation5 + $0x198] sm:$0xff]
    %v234 = vld [vmem:[#allocation5 + $0x1a0] sm:$0xff]
    %v235 = vld [vmem:[#allocation5 + $0x1a8] sm:$0xff]
    %v236 = vld [vmem:[#allocation5 + $0x1b0] sm:$0xff]
    %v237 = vld [vmem:[#allocation5 + $0x1b8] sm:$0xff]
    %v238 = vld [vmem:[#allocation5 + $0x1c0] sm:$0xff]
    %v239 = vld [vmem:[#allocation5 + $0x1c8] sm:$0xff]
    %v240 = vld [vmem:[#allocation5 + $0x1d0] sm:$0xff]
    %v241 = vld [vmem:[#allocation5 + $0x1d8] sm:$0xff]
    %v242 = vld [vmem:[#allocation5 + $0x1e0] sm:$0xff]
    %v243 = vld [vmem:[#allocation5 + $0x1e8] sm:$0xff]
    %v244 = vld [vmem:[#allocation5 + $0x1f0] sm:$0xff]
    %v245 = vld [vmem:[#allocation5 + $0x1f8] sm:$0xff]
    %v246 = vld [vmem:[#allocation7] sm:$0x1]
    %v247 = vlaneseq
    %v248 = vshrl.u32 %v247, 7
    %v249 = vsub.s32 0, %v248
    %v250 = vrot.slane %v246, %v249
    %251 = vmatprep.subr.mxu0 0.0
    %252 = vmatpush1.msra.mxu0 %v182
    %253 = vmatprep.subr.mxu0 0.0
    %254 = vmatpush1.msra.mxu0 %v183
    %255 = vmatprep.subr.mxu0 0.0
    %256 = vmatpush1.msra.mxu0 %v184
    %257 = vmatprep.subr.mxu0 0.0
    %258 = vmatpush1.msra.mxu0 %v185
    %259 = vmatprep.subr.mxu0 0.0
    %260 = vmatpush1.msra.mxu0 %v186
    %261 = vmatprep.subr.mxu0 0.0
    %262 = vmatpush1.msra.mxu0 %v187
    %263 = vmatprep.subr.mxu0 0.0
    %264 = vmatpush1.msra.mxu0 %v188
    %265 = vmatprep.subr.mxu0 0.0
    %266 = vmatpush1.msra.mxu0 %v189
    %267 = vmatprep.subr.mxu0 0.0
    %268 = vmatpush1.msra.mxu0 %v190
    %269 = vmatprep.subr.mxu0 0.0
    %270 = vmatpush1.msra.mxu0 %v191
    %271 = vmatprep.subr.mxu0 0.0
    %272 = vmatpush1.msra.mxu0 %v192
    %273 = vmatprep.subr.mxu0 0.0
    %274 = vmatpush1.msra.mxu0 %v193
    %275 = vmatprep.subr.mxu0 0.0
    %276 = vmatpush1.msra.mxu0 %v194
    %277 = vmatprep.subr.mxu0 0.0
    %278 = vmatpush1.msra.mxu0 %v195
    %279 = vmatprep.subr.mxu0 0.0
    %280 = vmatpush1.msra.mxu0 %v196
    %281 = vmatprep.subr.mxu0 0.0
    %282 = vmatpush1.msra.mxu0 %v197
    %283 = vmatprep.subr.mxu0 0.0
    %284 = vmatpush1.msra.mxu0 %v198
    %285 = vmatprep.subr.mxu0 0.0
    %286 = vmatpush1.msra.mxu0 %v199
    %287 = vmatprep.subr.mxu0 0.0
    %288 = vmatpush1.msra.mxu0 %v200
    %289 = vmatprep.subr.mxu0 0.0
    %290 = vmatpush1.msra.mxu0 %v201
    %291 = vmatprep.subr.mxu0 0.0
    %292 = vmatpush1.msra.mxu0 %v202
    %293 = vmatprep.subr.mxu0 0.0
    %294 = vmatpush1.msra.mxu0 %v203
    %295 = vmatprep.subr.mxu0 0.0
    %296 = vmatpush1.msra.mxu0 %v204
    %297 = vmatprep.subr.mxu0 0.0
    %298 = vmatpush1.msra.mxu0 %v205
    %299 = vmatprep.subr.mxu0 0.0
    %300 = vmatpush1.msra.mxu0 %v206
    %301 = vmatprep.subr.mxu0 0.0
    %302 = vmatpush1.msra.mxu0 %v207
    %303 = vmatprep.subr.mxu0 0.0
    %304 = vmatpush1.msra.mxu0 %v208
    %305 = vmatprep.subr.mxu0 0.0
    %306 = vmatpush1.msra.mxu0 %v209
    %307 = vmatprep.subr.mxu0 0.0
    %308 = vmatpush1.msra.mxu0 %v210
    %309 = vmatprep.subr.mxu0 0.0
    %310 = vmatpush1.msra.mxu0 %v211
    %311 = vmatprep.subr.mxu0 0.0
    %312 = vmatpush1.msra.mxu0 %v212
    %313 = vmatprep.subr.mxu0 0.0
    %314 = vmatpush1.msra.mxu0 %v213
    %315 = vmatprep.mubr.f32.mxu0 %v55
    %316 = vmatmul.mubr.f32.gmra.mrb[0].mxu0 %v54
    %v317 = vpop.f32.mrb[0].mxu0
    %v318 = vadd.f32 %v250, %v317
    %v319 = vpop.f32.mrb[0].mxu0
    %320 = vmatprep.mubr.f32.mxu0 %v59
    %321 = vmatmul.mubr.f32.gmra.mrb[0].mxu0 %v58
    %v322 = vpop.f32.mrb[0].mxu0
    %v323 = vadd.f32 %v250, %v322
    %v324 = vpop.f32.mrb[0].mxu0
    %325 = vmatprep.mubr.f32.mxu0 %v63
    %326 = vmatmul.mubr.f32.gmra.mrb[0].mxu0 %v62
    %v327 = vpop.f32.mrb[0].mxu0
    %v328 = vadd.f32 %v250, %v327
    %v329 = vpop.f32.mrb[0].mxu0
    %330 = vmatprep.mubr.f32.mxu0 %v67
    %331 = vmatmul.mubr.f32.gmra.mrb[0].mxu0 %v66
    %v332 = vpop.f32.mrb[0].mxu0
    %v333 = vadd.f32 %v250, %v332
    %v334 = vpop.f32.mrb[0].mxu0
    %335 = vmatprep.mubr.f32.mxu0 %v71
    %336 = vmatmul.mubr.f32.gmra.mrb[0].mxu0 %v70
    %v337 = vpop.f32.mrb[0].mxu0
    %v338 = vadd.f32 %v250, %v337
    %v339 = vpop.f32.mrb[0].mxu0
    %340 = vmatprep.mubr.f32.mxu0 %v75
    %341 = vmatmul.mubr.f32.gmra.mrb[0].mxu0 %v74
    %v342 = vpop.f32.mrb[0].mxu0
    %v343 = vadd.f32 %v250, %v342
    %v344 = vpop.f32.mrb[0].mxu0
    %345 = vmatprep.mubr.f32.mxu0 %v79
    %346 = vmatmul.mubr.f32.gmra.mrb[0].mxu0 %v78
    %v347 = vpop.f32.mrb[0].mxu0
    %v348 = vadd.f32 %v250, %v347
    %v349 = vpop.f32.mrb[0].mxu0
    %350 = vmatprep.mubr.f32.mxu0 %v83
    %351 = vmatmul.mubr.f32.gmra.mrb[0].mxu0 %v82
    %v352 = vpop.f32.mrb[0].mxu0
    %v353 = vadd.f32 %v250, %v352
    %v354 = vpop.f32.mrb[0].mxu0
    %355 = vmatprep.mubr.f32.mxu0 %v87
    %356 = vmatmul.mubr.f32.gmra.mrb[0].mxu0 %v86
    %v357 = vpop.f32.mrb[0].mxu0
    %v358 = vadd.f32 %v250, %v357
    %v359 = vpop.f32.mrb[0].mxu0
    %360 = vmatprep.mubr.f32.mxu0 %v91
    %361 = vmatmul.mubr.f32.gmra.mrb[0].mxu0 %v90
    %v362 = vpop.f32.mrb[0].mxu0
    %v363 = vadd.f32 %v250, %v362
    %v364 = vpop.f32.mrb[0].mxu0
    %365 = vmatprep.mubr.f32.mxu0 %v95
    %366 = vmatmul.mubr.f32.gmra.mrb[0].mxu0 %v94
    %v367 = vpop.f32.mrb[0].mxu0
    %v368 = vadd.f32 %v250, %v367
    %v369 = vpop.f32.mrb[0].mxu0
    %370 = vmatprep.mubr.f32.mxu0 %v99
    %371 = vmatmul.mubr.f32.gmra.mrb[0].mxu0 %v98
    %v372 = vpop.f32.mrb[0].mxu0
    %v373 = vadd.f32 %v250, %v372
    %v374 = vpop.f32.mrb[0].mxu0
    %375 = vmatprep.mubr.f32.mxu0 %v103
    %376 = vmatmul.mubr.f32.gmra.mrb[0].mxu0 %v102
    %v377 = vpop.f32.mrb[0].mxu0
    %v378 = vadd.f32 %v250, %v377
    %v379 = vpop.f32.mrb[0].mxu0
    %380 = vmatprep.mubr.f32.mxu0 %v107
    %381 = vmatmul.mubr.f32.gmra.mrb[0].mxu0 %v106
    %v382 = vpop.f32.mrb[0].mxu0
    %v383 = vadd.f32 %v250, %v382
    %v384 = vpop.f32.mrb[0].mxu0
    %385 = vmatprep.mubr.f32.mxu0 %v111
    %386 = vmatmul.mubr.f32.gmra.mrb[0].mxu0 %v110
    %v387 = vpop.f32.mrb[0].mxu0
    %v388 = vadd.f32 %v250, %v387
    %v389 = vpop.f32.mrb[0].mxu0
    %390 = vmatprep.mubr.f32.mxu0 %v115
    %391 = vmatmul.mubr.f32.gmra.mrb[0].mxu0 %v114
    %v392 = vpop.f32.mrb[0].mxu0
    %v393 = vadd.f32 %v250, %v392
    %v394 = vpop.f32.mrb[0].mxu0
    %395 = vmatprep.mubr.f32.mxu0 %v119
    %396 = vmatmul.mubr.f32.gmra.mrb[0].mxu0 %v118
    %v397 = vpop.f32.mrb[0].mxu0
    %v398 = vadd.f32 %v250, %v397
    %v399 = vpop.f32.mrb[0].mxu0
    %400 = vmatprep.mubr.f32.mxu0 %v123
    %401 = vmatmul.mubr.f32.gmra.mrb[0].mxu0 %v122
    %v402 = vpop.f32.mrb[0].mxu0
    %v403 = vadd.f32 %v250, %v402
    %v404 = vpop.f32.mrb[0].mxu0
    %405 = vmatprep.mubr.f32.mxu0 %v127
    %406 = vmatmul.mubr.f32.gmra.mrb[0].mxu0 %v126
    %v407 = vpop.f32.mrb[0].mxu0
    %v408 = vadd.f32 %v250, %v407
    %v409 = vpop.f32.mrb[0].mxu0
    %410 = vmatprep.mubr.f32.mxu0 %v131
    %411 = vmatmul.mubr.f32.gmra.mrb[0].mxu0 %v130
    %v412 = vpop.f32.mrb[0].mxu0
    %v413 = vadd.f32 %v250, %v412
    %v414 = vpop.f32.mrb[0].mxu0
    %415 = vmatprep.mubr.f32.mxu0 %v135
    %416 = vmatmul.mubr.f32.gmra.mrb[0].mxu0 %v134
    %v417 = vpop.f32.mrb[0].mxu0
    %v418 = vadd.f32 %v250, %v417
    %v419 = vpop.f32.mrb[0].mxu0
    %420 = vmatprep.mubr.f32.mxu0 %v139
    %421 = vmatmul.mubr.f32.gmra.mrb[0].mxu0 %v138
    %v422 = vpop.f32.mrb[0].mxu0
    %v423 = vadd.f32 %v250, %v422
    %v424 = vpop.f32.mrb[0].mxu0
    %425 = vmatprep.mubr.f32.mxu0 %v143
    %426 = vmatmul.mubr.f32.gmra.mrb[0].mxu0 %v142
    %v427 = vpop.f32.mrb[0].mxu0
    %v428 = vadd.f32 %v250, %v427
    %v429 = vpop.f32.mrb[0].mxu0
    %430 = vmatprep.mubr.f32.mxu0 %v147
    %431 = vmatmul.mubr.f32.gmra.mrb[0].mxu0 %v146
    %v432 = vpop.f32.mrb[0].mxu0
    %v433 = vadd.f32 %v250, %v432
    %v434 = vpop.f32.mrb[0].mxu0
    %435 = vmatprep.mubr.f32.mxu0 %v151
    %436 = vmatmul.mubr.f32.gmra.mrb[0].mxu0 %v150
    %v437 = vpop.f32.mrb[0].mxu0
    %v438 = vadd.f32 %v250, %v437
    %v439 = vpop.f32.mrb[0].mxu0
    %440 = vmatprep.mubr.f32.mxu0 %v155
    %441 = vmatmul.mubr.f32.gmra.mrb[0].mxu0 %v154
    %v442 = vpop.f32.mrb[0].mxu0
    %v443 = vadd.f32 %v250, %v442
    %v444 = vpop.f32.mrb[0].mxu0
    %445 = vmatprep.mubr.f32.mxu0 %v159
    %446 = vmatmul.mubr.f32.gmra.mrb[0].mxu0 %v158
    %v447 = vpop.f32.mrb[0].mxu0
    %v448 = vadd.f32 %v250, %v447
    %v449 = vpop.f32.mrb[0].mxu0
    %450 = vmatprep.mubr.f32.mxu0 %v163
    %451 = vmatmul.mubr.f32.gmra.mrb[0].mxu0 %v162
    %v452 = vpop.f32.mrb[0].mxu0
    %v453 = vadd.f32 %v250, %v452
    %v454 = vpop.f32.mrb[0].mxu0
    %455 = vmatprep.mubr.f32.mxu0 %v167
    %456 = vmatmul.mubr.f32.gmra.mrb[0].mxu0 %v166
    %v457 = vpop.f32.mrb[0].mxu0
    %v458 = vadd.f32 %v250, %v457
    %v459 = vpop.f32.mrb[0].mxu0
    %460 = vmatprep.mubr.f32.mxu0 %v171
    %461 = vmatmul.mubr.f32.gmra.mrb[0].mxu0 %v170
    %v462 = vpop.f32.mrb[0].mxu0
    %v463 = vadd.f32 %v250, %v462
    %v464 = vpop.f32.mrb[0].mxu0
    %465 = vmatprep.mubr.f32.mxu0 %v175
    %466 = vmatmul.mubr.f32.gmra.mrb[0].mxu0 %v174
    %v467 = vpop.f32.mrb[0].mxu0
    %v468 = vadd.f32 %v250, %v467
    %v469 = vpop.f32.mrb[0].mxu0
    %470 = vmatprep.mubr.f32.mxu0 %v179
    %471 = vmatmul.mubr.f32.gmra.mrb[0].mxu0 %v178
    %v472 = vpop.f32.mrb[0].mxu0
    %v473 = vadd.f32 %v250, %v472
    %v474 = vpop.f32.mrb[0].mxu0
    %475 = vdwg.mxu0
    %476 = vmatprep.subr.mxu0 0.0
    %477 = vmatpush1.msra.mxu0 %v214
    %478 = vmatprep.subr.mxu0 0.0
    %479 = vmatpush1.msra.mxu0 %v215
    %480 = vmatprep.subr.mxu0 0.0
    %481 = vmatpush1.msra.mxu0 %v216
    %482 = vmatprep.subr.mxu0 0.0
    %483 = vmatpush1.msra.mxu0 %v217
    %484 = vmatprep.subr.mxu0 0.0
    %485 = vmatpush1.msra.mxu0 %v218
    %486 = vmatprep.subr.mxu0 0.0
    %487 = vmatpush1.msra.mxu0 %v219
    %488 = vmatprep.subr.mxu0 0.0
    %489 = vmatpush1.msra.mxu0 %v220
    %490 = vmatprep.subr.mxu0 0.0
    %491 = vmatpush1.msra.mxu0 %v221
    %492 = vmatprep.subr.mxu0 0.0
    %493 = vmatpush1.msra.mxu0 %v222
    %494 = vmatprep.subr.mxu0 0.0
    %495 = vmatpush1.msra.mxu0 %v223
    %496 = vmatprep.subr.mxu0 0.0
    %497 = vmatpush1.msra.mxu0 %v224
    %498 = vmatprep.subr.mxu0 0.0
    %499 = vmatpush1.msra.mxu0 %v225
    %500 = vmatprep.subr.mxu0 0.0
    %501 = vmatpush1.msra.mxu0 %v226
    %502 = vmatprep.subr.mxu0 0.0
    %503 = vmatpush1.msra.mxu0 %v227
    %504 = vmatprep.subr.mxu0 0.0
    %505 = vmatpush1.msra.mxu0 %v228
    %506 = vmatprep.subr.mxu0 0.0
    %507 = vmatpush1.msra.mxu0 %v229
    %508 = vmatprep.subr.mxu0 0.0
    %509 = vmatpush1.msra.mxu0 %v230
    %510 = vmatprep.subr.mxu0 0.0
    %511 = vmatpush1.msra.mxu0 %v231
    %512 = vmatprep.subr.mxu0 0.0
    %513 = vmatpush1.msra.mxu0 %v232
    %514 = vmatprep.subr.mxu0 0.0
    %515 = vmatpush1.msra.mxu0 %v233
    %516 = vmatprep.subr.mxu0 0.0
    %517 = vmatpush1.msra.mxu0 %v234
    %518 = vmatprep.subr.mxu0 0.0
    %519 = vmatpush1.msra.mxu0 %v235
    %520 = vmatprep.subr.mxu0 0.0
    %521 = vmatpush1.msra.mxu0 %v236
    %522 = vmatprep.subr.mxu0 0.0
    %523 = vmatpush1.msra.mxu0 %v237
    %524 = vmatprep.subr.mxu0 0.0
    %525 = vmatpush1.msra.mxu0 %v238
    %526 = vmatprep.subr.mxu0 0.0
    %527 = vmatpush1.msra.mxu0 %v239
    %528 = vmatprep.subr.mxu0 0.0
    %529 = vmatpush1.msra.mxu0 %v240
    %530 = vmatprep.subr.mxu0 0.0
    %531 = vmatpush1.msra.mxu0 %v241
    %532 = vmatprep.subr.mxu0 0.0
    %533 = vmatpush1.msra.mxu0 %v242
    %534 = vmatprep.subr.mxu0 0.0
    %535 = vmatpush1.msra.mxu0 %v243
    %536 = vmatprep.subr.mxu0 0.0
    %537 = vmatpush1.msra.mxu0 %v244
    %538 = vmatprep.subr.mxu0 0.0
    %539 = vmatpush1.msra.mxu0 %v245
    %540 = vmatprep.mubr.f32.mxu0 %v57
    %541 = vmatmul.mubr.f32.gmra.mrb[0].mxu0 %v56
    %v542 = vpop.f32.mrb[0].mxu0
    %v543 = vadd.f32 %v318, %v542
    %v544 = vpop.f32.mrb[0].mxu0
    %545 = vmatprep.mubr.f32.mxu0 %v61
    %546 = vmatmul.mubr.f32.gmra.mrb[0].mxu0 %v60
    %v547 = vpop.f32.mrb[0].mxu0
    %v548 = vadd.f32 %v323, %v547
    %v549 = vpop.f32.mrb[0].mxu0
    %550 = vmatprep.mubr.f32.mxu0 %v65
    %551 = vmatmul.mubr.f32.gmra.mrb[0].mxu0 %v64
    %v552 = vpop.f32.mrb[0].mxu0
    %v553 = vadd.f32 %v328, %v552
    %v554 = vpop.f32.mrb[0].mxu0
    %555 = vmatprep.mubr.f32.mxu0 %v69
    %556 = vmatmul.mubr.f32.gmra.mrb[0].mxu0 %v68
    %v557 = vpop.f32.mrb[0].mxu0
    %v558 = vadd.f32 %v333, %v557
    %v559 = vpop.f32.mrb[0].mxu0
    %560 = vmatprep.mubr.f32.mxu0 %v73
    %561 = vmatmul.mubr.f32.gmra.mrb[0].mxu0 %v72
    %v562 = vpop.f32.mrb[0].mxu0
    %v563 = vadd.f32 %v338, %v562
    %v564 = vpop.f32.mrb[0].mxu0
    %565 = vmatprep.mubr.f32.mxu0 %v77
    %566 = vmatmul.mubr.f32.gmra.mrb[0].mxu0 %v76
    %v567 = vpop.f32.mrb[0].mxu0
    %v568 = vadd.f32 %v343, %v567
    %v569 = vpop.f32.mrb[0].mxu0
    %570 = vmatprep.mubr.f32.mxu0 %v81
    %571 = vmatmul.mubr.f32.gmra.mrb[0].mxu0 %v80
    %v572 = vpop.f32.mrb[0].mxu0
    %v573 = vadd.f32 %v348, %v572
    %v574 = vpop.f32.mrb[0].mxu0
    %575 = vmatprep.mubr.f32.mxu0 %v85
    %576 = vmatmul.mubr.f32.gmra.mrb[0].mxu0 %v84
    %v577 = vpop.f32.mrb[0].mxu0
    %v578 = vadd.f32 %v353, %v577
    %v579 = vpop.f32.mrb[0].mxu0
    %580 = vmatprep.mubr.f32.mxu0 %v89
    %581 = vmatmul.mubr.f32.gmra.mrb[0].mxu0 %v88
    %v582 = vpop.f32.mrb[0].mxu0
    %v583 = vadd.f32 %v358, %v582
    %v584 = vpop.f32.mrb[0].mxu0
    %585 = vmatprep.mubr.f32.mxu0 %v93
    %586 = vmatmul.mubr.f32.gmra.mrb[0].mxu0 %v92
    %v587 = vpop.f32.mrb[0].mxu0
    %v588 = vadd.f32 %v363, %v587
    %v589 = vpop.f32.mrb[0].mxu0
    %590 = vmatprep.mubr.f32.mxu0 %v97
    %591 = vmatmul.mubr.f32.gmra.mrb[0].mxu0 %v96
    %v592 = vpop.f32.mrb[0].mxu0
    %v593 = vadd.f32 %v368, %v592
    %v594 = vpop.f32.mrb[0].mxu0
    %595 = vmatprep.mubr.f32.mxu0 %v101
    %596 = vmatmul.mubr.f32.gmra.mrb[0].mxu0 %v100
    %v597 = vpop.f32.mrb[0].mxu0
    %v598 = vadd.f32 %v373, %v597
    %v599 = vpop.f32.mrb[0].mxu0
    %600 = vmatprep.mubr.f32.mxu0 %v105
    %601 = vmatmul.mubr.f32.gmra.mrb[0].mxu0 %v104
    %v602 = vpop.f32.mrb[0].mxu0
    %v603 = vadd.f32 %v378, %v602
    %v604 = vpop.f32.mrb[0].mxu0
    %605 = vmatprep.mubr.f32.mxu0 %v109
    %606 = vmatmul.mubr.f32.gmra.mrb[0].mxu0 %v108
    %v607 = vpop.f32.mrb[0].mxu0
    %v608 = vadd.f32 %v383, %v607
    %v609 = vpop.f32.mrb[0].mxu0
    %610 = vmatprep.mubr.f32.mxu0 %v113
    %611 = vmatmul.mubr.f32.gmra.mrb[0].mxu0 %v112
    %v612 = vpop.f32.mrb[0].mxu0
    %v613 = vadd.f32 %v388, %v612
    %v614 = vpop.f32.mrb[0].mxu0
    %615 = vmatprep.mubr.f32.mxu0 %v117
    %616 = vmatmul.mubr.f32.gmra.mrb[0].mxu0 %v116
    %v617 = vpop.f32.mrb[0].mxu0
    %v618 = vadd.f32 %v393, %v617
    %v619 = vpop.f32.mrb[0].mxu0
    %620 = vmatprep.mubr.f32.mxu0 %v121
    %621 = vmatmul.mubr.f32.gmra.mrb[0].mxu0 %v120
    %v622 = vpop.f32.mrb[0].mxu0
    %v623 = vadd.f32 %v398, %v622
    %v624 = vpop.f32.mrb[0].mxu0
    %625 = vmatprep.mubr.f32.mxu0 %v125
    %626 = vmatmul.mubr.f32.gmra.mrb[0].mxu0 %v124
    %v627 = vpop.f32.mrb[0].mxu0
    %v628 = vadd.f32 %v403, %v627
    %v629 = vpop.f32.mrb[0].mxu0
    %630 = vmatprep.mubr.f32.mxu0 %v129
    %631 = vmatmul.mubr.f32.gmra.mrb[0].mxu0 %v128
    %v632 = vpop.f32.mrb[0].mxu0
    %v633 = vadd.f32 %v408, %v632
    %v634 = vpop.f32.mrb[0].mxu0
    %635 = vmatprep.mubr.f32.mxu0 %v133
    %636 = vmatmul.mubr.f32.gmra.mrb[0].mxu0 %v132
    %v637 = vpop.f32.mrb[0].mxu0
    %v638 = vadd.f32 %v413, %v637
    %v639 = vpop.f32.mrb[0].mxu0
    %640 = vmatprep.mubr.f32.mxu0 %v137
    %641 = vmatmul.mubr.f32.gmra.mrb[0].mxu0 %v136
    %v642 = vpop.f32.mrb[0].mxu0
    %v643 = vadd.f32 %v418, %v642
    %v644 = vpop.f32.mrb[0].mxu0
    %645 = vmatprep.mubr.f32.mxu0 %v141
    %646 = vmatmul.mubr.f32.gmra.mrb[0].mxu0 %v140
    %v647 = vpop.f32.mrb[0].mxu0
    %v648 = vadd.f32 %v423, %v647
    %v649 = vpop.f32.mrb[0].mxu0
    %650 = vmatprep.mubr.f32.mxu0 %v145
    %651 = vmatmul.mubr.f32.gmra.mrb[0].mxu0 %v144
    %v652 = vpop.f32.mrb[0].mxu0
    %v653 = vadd.f32 %v428, %v652
    %v654 = vpop.f32.mrb[0].mxu0
    %655 = vmatprep.mubr.f32.mxu0 %v149
    %656 = vmatmul.mubr.f32.gmra.mrb[0].mxu0 %v148
    %v657 = vpop.f32.mrb[0].mxu0
    %v658 = vadd.f32 %v433, %v657
    %v659 = vpop.f32.mrb[0].mxu0
    %660 = vmatprep.mubr.f32.mxu0 %v153
    %661 = vmatmul.mubr.f32.gmra.mrb[0].mxu0 %v152
    %v662 = vpop.f32.mrb[0].mxu0
    %v663 = vadd.f32 %v438, %v662
    %v664 = vpop.f32.mrb[0].mxu0
    %665 = vmatprep.mubr.f32.mxu0 %v157
    %666 = vmatmul.mubr.f32.gmra.mrb[0].mxu0 %v156
    %v667 = vpop.f32.mrb[0].mxu0
    %v668 = vadd.f32 %v443, %v667
    %v669 = vpop.f32.mrb[0].mxu0
    %670 = vmatprep.mubr.f32.mxu0 %v161
    %671 = vmatmul.mubr.f32.gmra.mrb[0].mxu0 %v160
    %v672 = vpop.f32.mrb[0].mxu0
    %v673 = vadd.f32 %v448, %v672
    %v674 = vpop.f32.mrb[0].mxu0
    %675 = vmatprep.mubr.f32.mxu0 %v165
    %676 = vmatmul.mubr.f32.gmra.mrb[0].mxu0 %v164
    %v677 = vpop.f32.mrb[0].mxu0
    %v678 = vadd.f32 %v453, %v677
    %v679 = vpop.f32.mrb[0].mxu0
    %680 = vmatprep.mubr.f32.mxu0 %v169
    %681 = vmatmul.mubr.f32.gmra.mrb[0].mxu0 %v168
    %v682 = vpop.f32.mrb[0].mxu0
    %v683 = vadd.f32 %v458, %v682
    %v684 = vpop.f32.mrb[0].mxu0
    %685 = vmatprep.mubr.f32.mxu0 %v173
    %686 = vmatmul.mubr.f32.gmra.mrb[0].mxu0 %v172
    %v687 = vpop.f32.mrb[0].mxu0
    %v688 = vadd.f32 %v463, %v687
    %v689 = vpop.f32.mrb[0].mxu0
    %690 = vmatprep.mubr.f32.mxu0 %v177
    %691 = vmatmul.mubr.f32.gmra.mrb[0].mxu0 %v176
    %v692 = vpop.f32.mrb[0].mxu0
    %v693 = vadd.f32 %v468, %v692
    %v694 = vpop.f32.mrb[0].mxu0
    %695 = vmatprep.mubr.f32.mxu0 %v181
    %696 = vmatmul.mubr.f32.gmra.mrb[0].mxu0 %v180
    %v697 = vpop.f32.mrb[0].mxu0
    %v698 = vadd.f32 %v473, %v697
    %v699 = vpop.f32.mrb[0].mxu0
    %700 = vdwg.mxu0
    %701 = vadd.xlane.f32.xlu0 %v543
    %v702 = vpop.xlane.xlu0 %701
    %703 = vadd.xlane.f32.xlu0 %v548
    %v704 = vpop.xlane.xlu0 %703
    %705 = vadd.xlane.f32.xlu0 %v553
    %v706 = vpop.xlane.xlu0 %705
    %707 = vadd.xlane.f32.xlu0 %v558
    %v708 = vpop.xlane.xlu0 %707
    %709 = vadd.xlane.f32.xlu0 %v563
    %v710 = vpop.xlane.xlu0 %709
    %711 = vadd.xlane.f32.xlu0 %v568
    %v712 = vpop.xlane.xlu0 %711
    %713 = vadd.xlane.f32.xlu0 %v573
    %v714 = vpop.xlane.xlu0 %713
    %715 = vadd.xlane.f32.xlu0 %v578
    %v716 = vpop.xlane.xlu0 %715
    %717 = vadd.xlane.f32.xlu0 %v583
    %v718 = vpop.xlane.xlu0 %717
    %719 = vadd.xlane.f32.xlu0 %v588
    %v720 = vpop.xlane.xlu0 %719
    %721 = vadd.xlane.f32.xlu0 %v593
    %v722 = vpop.xlane.xlu0 %721
    %723 = vadd.xlane.f32.xlu0 %v598
    %v724 = vpop.xlane.xlu0 %723
    %725 = vadd.xlane.f32.xlu0 %v603
    %v726 = vpop.xlane.xlu0 %725
    %727 = vadd.xlane.f32.xlu0 %v608
    %v728 = vpop.xlane.xlu0 %727
    %729 = vadd.xlane.f32.xlu0 %v613
    %v730 = vpop.xlane.xlu0 %729
    %731 = vadd.xlane.f32.xlu0 %v618
    %v732 = vpop.xlane.xlu0 %731
    %733 = vadd.xlane.f32.xlu0 %v623
    %v734 = vpop.xlane.xlu0 %733
    %735 = vadd.xlane.f32.xlu0 %v628
    %v736 = vpop.xlane.xlu0 %735
    %737 = vadd.xlane.f32.xlu0 %v633
    %v738 = vpop.xlane.xlu0 %737
    %739 = vadd.xlane.f32.xlu0 %v638
    %v740 = vpop.xlane.xlu0 %739
    %741 = vadd.xlane.f32.xlu0 %v643
    %v742 = vpop.xlane.xlu0 %741
    %743 = vadd.xlane.f32.xlu0 %v648
    %v744 = vpop.xlane.xlu0 %743
    %745 = vadd.xlane.f32.xlu0 %v653
    %v746 = vpop.xlane.xlu0 %745
    %747 = vadd.xlane.f32.xlu0 %v658
    %v748 = vpop.xlane.xlu0 %747
    %749 = vadd.xlane.f32.xlu0 %v663
    %v750 = vpop.xlane.xlu0 %749
    %751 = vadd.xlane.f32.xlu0 %v668
    %v752 = vpop.xlane.xlu0 %751
    %753 = vadd.xlane.f32.xlu0 %v673
    %v754 = vpop.xlane.xlu0 %753
    %755 = vadd.xlane.f32.xlu0 %v678
    %v756 = vpop.xlane.xlu0 %755
    %757 = vadd.xlane.f32.xlu0 %v683
    %v758 = vpop.xlane.xlu0 %757
    %759 = vadd.xlane.f32.xlu0 %v688
    %v760 = vpop.xlane.xlu0 %759
    %761 = vadd.xlane.f32.xlu0 %v693
    %v762 = vpop.xlane.xlu0 %761
    %763 = vadd.xlane.f32.xlu0 %v698
    %v764 = vpop.xlane.xlu0 %763
    %v765 = vmul.f32 %v543, %v543
    %v766 = vmul.f32 %v548, %v548
    %v767 = vmul.f32 %v553, %v553
    %v768 = vmul.f32 %v558, %v558
    %v769 = vmul.f32 %v563, %v563
    %v770 = vmul.f32 %v568, %v568
    %v771 = vmul.f32 %v573, %v573
    %v772 = vmul.f32 %v578, %v578
    %v773 = vmul.f32 %v583, %v583
    %v774 = vmul.f32 %v588, %v588
    %v775 = vmul.f32 %v593, %v593
    %v776 = vmul.f32 %v598, %v598
    %v777 = vmul.f32 %v603, %v603
    %v778 = vmul.f32 %v608, %v608
    %v779 = vmul.f32 %v613, %v613
    %v780 = vmul.f32 %v618, %v618
    %v781 = vmul.f32 %v623, %v623
    %v782 = vmul.f32 %v628, %v628
    %v783 = vmul.f32 %v633, %v633
    %v784 = vmul.f32 %v638, %v638
    %v785 = vmul.f32 %v643, %v643
    %v786 = vmul.f32 %v648, %v648
    %v787 = vmul.f32 %v653, %v653
    %v788 = vmul.f32 %v658, %v658
    %v789 = vmul.f32 %v663, %v663
    %v790 = vmul.f32 %v668, %v668
    %v791 = vmul.f32 %v673, %v673
    %v792 = vmul.f32 %v678, %v678
    %v793 = vmul.f32 %v683, %v683
    %v794 = vmul.f32 %v688, %v688
    %v795 = vmul.f32 %v693, %v693
    %v796 = vmul.f32 %v698, %v698
    %797 = vadd.xlane.f32.xlu0 %v765
    %v798 = vpop.xlane.xlu0 %797
    %799 = vadd.xlane.f32.xlu0 %v766
    %v800 = vpop.xlane.xlu0 %799
    %801 = vadd.xlane.f32.xlu0 %v767
    %v802 = vpop.xlane.xlu0 %801
    %803 = vadd.xlane.f32.xlu0 %v768
    %v804 = vpop.xlane.xlu0 %803
    %805 = vadd.xlane.f32.xlu0 %v769
    %v806 = vpop.xlane.xlu0 %805
    %807 = vadd.xlane.f32.xlu0 %v770
    %v808 = vpop.xlane.xlu0 %807
    %809 = vadd.xlane.f32.xlu0 %v771
    %v810 = vpop.xlane.xlu0 %809
    %811 = vadd.xlane.f32.xlu0 %v772
    %v812 = vpop.xlane.xlu0 %811
    %813 = vadd.xlane.f32.xlu0 %v773
    %v814 = vpop.xlane.xlu0 %813
    %815 = vadd.xlane.f32.xlu0 %v774
    %v816 = vpop.xlane.xlu0 %815
    %817 = vadd.xlane.f32.xlu0 %v775
    %v818 = vpop.xlane.xlu0 %817
    %819 = vadd.xlane.f32.xlu0 %v776
    %v820 = vpop.xlane.xlu0 %819
    %821 = vadd.xlane.f32.xlu0 %v777
    %v822 = vpop.xlane.xlu0 %821
    %823 = vadd.xlane.f32.xlu0 %v778
    %v824 = vpop.xlane.xlu0 %823
    %825 = vadd.xlane.f32.xlu0 %v779
    %v826 = vpop.xlane.xlu0 %825
    %827 = vadd.xlane.f32.xlu0 %v780
    %v828 = vpop.xlane.xlu0 %827
    %829 = vadd.xlane.f32.xlu0 %v781
    %v830 = vpop.xlane.xlu0 %829
    %831 = vadd.xlane.f32.xlu0 %v782
    %v832 = vpop.xlane.xlu0 %831
    %833 = vadd.xlane.f32.xlu0 %v783
    %v834 = vpop.xlane.xlu0 %833
    %835 = vadd.xlane.f32.xlu0 %v784
    %v836 = vpop.xlane.xlu0 %835
    %837 = vadd.xlane.f32.xlu0 %v785
    %v838 = vpop.xlane.xlu0 %837
    %839 = vadd.xlane.f32.xlu0 %v786
    %v840 = vpop.xlane.xlu0 %839
    %841 = vadd.xlane.f32.xlu0 %v787
    %v842 = vpop.xlane.xlu0 %841
    %843 = vadd.xlane.f32.xlu0 %v788
    %v844 = vpop.xlane.xlu0 %843
    %845 = vadd.xlane.f32.xlu0 %v789
    %v846 = vpop.xlane.xlu0 %845
    %847 = vadd.xlane.f32.xlu0 %v790
    %v848 = vpop.xlane.xlu0 %847
    %849 = vadd.xlane.f32.xlu0 %v791
    %v850 = vpop.xlane.xlu0 %849
    %851 = vadd.xlane.f32.xlu0 %v792
    %v852 = vpop.xlane.xlu0 %851
    %853 = vadd.xlane.f32.xlu0 %v793
    %v854 = vpop.xlane.xlu0 %853
    %855 = vadd.xlane.f32.xlu0 %v794
    %v856 = vpop.xlane.xlu0 %855
    %857 = vadd.xlane.f32.xlu0 %v795
    %v858 = vpop.xlane.xlu0 %857
    %859 = vadd.xlane.f32.xlu0 %v796
    %v860 = vpop.xlane.xlu0 %859
    %v861 = vmul.f32 %v702, 0.03125
    %v862 = vmul.f32 %v704, 0.03125
    %v863 = vmul.f32 %v706, 0.03125
    %v864 = vmul.f32 %v708, 0.03125
    %v865 = vmul.f32 %v710, 0.03125
    %v866 = vmul.f32 %v712, 0.03125
    %v867 = vmul.f32 %v714, 0.03125
    %v868 = vmul.f32 %v716, 0.03125
    %v869 = vmul.f32 %v718, 0.03125
    %v870 = vmul.f32 %v720, 0.03125
    %v871 = vmul.f32 %v722, 0.03125
    %v872 = vmul.f32 %v724, 0.03125
    %v873 = vmul.f32 %v726, 0.03125
    %v874 = vmul.f32 %v728, 0.03125
    %v875 = vmul.f32 %v730, 0.03125
    %v876 = vmul.f32 %v732, 0.03125
    %v877 = vmul.f32 %v734, 0.03125
    %v878 = vmul.f32 %v736, 0.03125
    %v879 = vmul.f32 %v738, 0.03125
    %v880 = vmul.f32 %v740, 0.03125
    %v881 = vmul.f32 %v742, 0.03125
    %v882 = vmul.f32 %v744, 0.03125
    %v883 = vmul.f32 %v746, 0.03125
    %v884 = vmul.f32 %v748, 0.03125
    %v885 = vmul.f32 %v750, 0.03125
    %v886 = vmul.f32 %v752, 0.03125
    %v887 = vmul.f32 %v754, 0.03125
    %v888 = vmul.f32 %v756, 0.03125
    %v889 = vmul.f32 %v758, 0.03125
    %v890 = vmul.f32 %v760, 0.03125
    %v891 = vmul.f32 %v762, 0.03125
    %v892 = vmul.f32 %v764, 0.03125
    %v893 = vmul.f32 %v798, 0.03125
    %v894 = vmul.f32 %v800, 0.03125
    %v895 = vmul.f32 %v802, 0.03125
    %v896 = vmul.f32 %v804, 0.03125
    %v897 = vmul.f32 %v806, 0.03125
    %v898 = vmul.f32 %v808, 0.03125
    %v899 = vmul.f32 %v810, 0.03125
    %v900 = vmul.f32 %v812, 0.03125
    %v901 = vmul.f32 %v814, 0.03125
    %v902 = vmul.f32 %v816, 0.03125
    %v903 = vmul.f32 %v818, 0.03125
    %v904 = vmul.f32 %v820, 0.03125
    %v905 = vmul.f32 %v822, 0.03125
    %v906 = vmul.f32 %v824, 0.03125
    %v907 = vmul.f32 %v826, 0.03125
    %v908 = vmul.f32 %v828, 0.03125
    %v909 = vmul.f32 %v830, 0.03125
    %v910 = vmul.f32 %v832, 0.03125
    %v911 = vmul.f32 %v834, 0.03125
    %v912 = vmul.f32 %v836, 0.03125
    %v913 = vmul.f32 %v838, 0.03125
    %v914 = vmul.f32 %v840, 0.03125
    %v915 = vmul.f32 %v842, 0.03125
    %v916 = vmul.f32 %v844, 0.03125
    %v917 = vmul.f32 %v846, 0.03125
    %v918 = vmul.f32 %v848, 0.03125
    %v919 = vmul.f32 %v850, 0.03125
    %v920 = vmul.f32 %v852, 0.03125
    %v921 = vmul.f32 %v854, 0.03125
    %v922 = vmul.f32 %v856, 0.03125
    %v923 = vmul.f32 %v858, 0.03125
    %v924 = vmul.f32 %v860, 0.03125
    %v925 = vmul.f32 %v861, %v861
    %v926 = vmul.f32 %v862, %v862
    %v927 = vmul.f32 %v863, %v863
    %v928 = vmul.f32 %v864, %v864
    %v929 = vmul.f32 %v865, %v865
    %v930 = vmul.f32 %v866, %v866
    %v931 = vmul.f32 %v867, %v867
    %v932 = vmul.f32 %v868, %v868
    %v933 = vmul.f32 %v869, %v869
    %v934 = vmul.f32 %v870, %v870
    %v935 = vmul.f32 %v871, %v871
    %v936 = vmul.f32 %v872, %v872
    %v937 = vmul.f32 %v873, %v873
    %v938 = vmul.f32 %v874, %v874
    %v939 = vmul.f32 %v875, %v875
    %v940 = vmul.f32 %v876, %v876
    %v941 = vmul.f32 %v877, %v877
    %v942 = vmul.f32 %v878, %v878
    %v943 = vmul.f32 %v879, %v879
    %v944 = vmul.f32 %v880, %v880
    %v945 = vmul.f32 %v881, %v881
    %v946 = vmul.f32 %v882, %v882
    %v947 = vmul.f32 %v883, %v883
    %v948 = vmul.f32 %v884, %v884
    %v949 = vmul.f32 %v885, %v885
    %v950 = vmul.f32 %v886, %v886
    %v951 = vmul.f32 %v887, %v887
    %v952 = vmul.f32 %v888, %v888
    %v953 = vmul.f32 %v889, %v889
    %v954 = vmul.f32 %v890, %v890
    %v955 = vmul.f32 %v891, %v891
    %v956 = vmul.f32 %v892, %v892
    %v957 = vsub.f32 %v893, %v925
    %v958 = vsub.f32 %v894, %v926
    %v959 = vsub.f32 %v895, %v927
    %v960 = vsub.f32 %v896, %v928
    %v961 = vsub.f32 %v897, %v929
    %v962 = vsub.f32 %v898, %v930
    %v963 = vsub.f32 %v899, %v931
    %v964 = vsub.f32 %v900, %v932
    %v965 = vsub.f32 %v901, %v933
    %v966 = vsub.f32 %v902, %v934
    %v967 = vsub.f32 %v903, %v935
    %v968 = vsub.f32 %v904, %v936
    %v969 = vsub.f32 %v905, %v937
    %v970 = vsub.f32 %v906, %v938
    %v971 = vsub.f32 %v907, %v939
    %v972 = vsub.f32 %v908, %v940
    %v973 = vsub.f32 %v909, %v941
    %v974 = vsub.f32 %v910, %v942
    %v975 = vsub.f32 %v911, %v943
    %v976 = vsub.f32 %v912, %v944
    %v977 = vsub.f32 %v913, %v945
    %v978 = vsub.f32 %v914, %v946
    %v979 = vsub.f32 %v915, %v947
    %v980 = vsub.f32 %v916, %v948
    %v981 = vsub.f32 %v917, %v949
    %v982 = vsub.f32 %v918, %v950
    %v983 = vsub.f32 %v919, %v951
    %v984 = vsub.f32 %v920, %v952
    %v985 = vsub.f32 %v921, %v953
    %v986 = vsub.f32 %v922, %v954
    %v987 = vsub.f32 %v923, %v955
    %v988 = vsub.f32 %v924, %v956
    %v989 = vmax.f32 %v957, 0.0
    %v990 = vmax.f32 %v958, 0.0
    %v991 = vmax.f32 %v959, 0.0
    %v992 = vmax.f32 %v960, 0.0
    %v993 = vmax.f32 %v961, 0.0
    %v994 = vmax.f32 %v962, 0.0
    %v995 = vmax.f32 %v963, 0.0
    %v996 = vmax.f32 %v964, 0.0
    %v997 = vmax.f32 %v965, 0.0
    %v998 = vmax.f32 %v966, 0.0
    %v999 = vmax.f32 %v967, 0.0
    %v1000 = vmax.f32 %v968, 0.0
    %v1001 = vmax.f32 %v969, 0.0
    %v1002 = vmax.f32 %v970, 0.0
    %v1003 = vmax.f32 %v971, 0.0
    %v1004 = vmax.f32 %v972, 0.0
    %v1005 = vmax.f32 %v973, 0.0
    %v1006 = vmax.f32 %v974, 0.0
    %v1007 = vmax.f32 %v975, 0.0
    %v1008 = vmax.f32 %v976, 0.0
    %v1009 = vmax.f32 %v977, 0.0
    %v1010 = vmax.f32 %v978, 0.0
    %v1011 = vmax.f32 %v979, 0.0
    %v1012 = vmax.f32 %v980, 0.0
    %v1013 = vmax.f32 %v981, 0.0
    %v1014 = vmax.f32 %v982, 0.0
    %v1015 = vmax.f32 %v983, 0.0
    %v1016 = vmax.f32 %v984, 0.0
    %v1017 = vmax.f32 %v985, 0.0
    %v1018 = vmax.f32 %v986, 0.0
    %v1019 = vmax.f32 %v987, 0.0
    %v1020 = vmax.f32 %v988, 0.0
    %v1021 = vadd.f32 %v989, 1e-05
    %v1022 = vadd.f32 %v990, 1e-05
    %v1023 = vadd.f32 %v991, 1e-05
    %v1024 = vadd.f32 %v992, 1e-05
    %v1025 = vadd.f32 %v993, 1e-05
    %v1026 = vadd.f32 %v994, 1e-05
    %v1027 = vadd.f32 %v995, 1e-05
    %v1028 = vadd.f32 %v996, 1e-05
    %v1029 = vadd.f32 %v997, 1e-05
    %v1030 = vadd.f32 %v998, 1e-05
    %v1031 = vadd.f32 %v999, 1e-05
    %v1032 = vadd.f32 %v1000, 1e-05
    %v1033 = vadd.f32 %v1001, 1e-05
    %v1034 = vadd.f32 %v1002, 1e-05
    %v1035 = vadd.f32 %v1003, 1e-05
    %v1036 = vadd.f32 %v1004, 1e-05
    %v1037 = vadd.f32 %v1005, 1e-05
    %v1038 = vadd.f32 %v1006, 1e-05
    %v1039 = vadd.f32 %v1007, 1e-05
    %v1040 = vadd.f32 %v1008, 1e-05
    %v1041 = vadd.f32 %v1009, 1e-05
    %v1042 = vadd.f32 %v1010, 1e-05
    %v1043 = vadd.f32 %v1011, 1e-05
    %v1044 = vadd.f32 %v1012, 1e-05
    %v1045 = vadd.f32 %v1013, 1e-05
    %v1046 = vadd.f32 %v1014, 1e-05
    %v1047 = vadd.f32 %v1015, 1e-05
    %v1048 = vadd.f32 %v1016, 1e-05
    %v1049 = vadd.f32 %v1017, 1e-05
    %v1050 = vadd.f32 %v1018, 1e-05
    %v1051 = vadd.f32 %v1019, 1e-05
    %v1052 = vadd.f32 %v1020, 1e-05
    %v1053 = vrsqrt.pop %v1021
    %v1054 = vrsqrt.pop %v1022
    %v1055 = vrsqrt.pop %v1023
    %v1056 = vrsqrt.pop %v1024
    %v1057 = vrsqrt.pop %v1025
    %v1058 = vrsqrt.pop %v1026
    %v1059 = vrsqrt.pop %v1027
    %v1060 = vrsqrt.pop %v1028
    %v1061 = vrsqrt.pop %v1029
    %v1062 = vrsqrt.pop %v1030
    %v1063 = vrsqrt.pop %v1031
    %v1064 = vrsqrt.pop %v1032
    %v1065 = vrsqrt.pop %v1033
    %v1066 = vrsqrt.pop %v1034
    %v1067 = vrsqrt.pop %v1035
    %v1068 = vrsqrt.pop %v1036
    %v1069 = vrsqrt.pop %v1037
    %v1070 = vrsqrt.pop %v1038
    %v1071 = vrsqrt.pop %v1039
    %v1072 = vrsqrt.pop %v1040
    %v1073 = vrsqrt.pop %v1041
    %v1074 = vrsqrt.pop %v1042
    %v1075 = vrsqrt.pop %v1043
    %v1076 = vrsqrt.pop %v1044
    %v1077 = vrsqrt.pop %v1045
    %v1078 = vrsqrt.pop %v1046
    %v1079 = vrsqrt.pop %v1047
    %v1080 = vrsqrt.pop %v1048
    %v1081 = vrsqrt.pop %v1049
    %v1082 = vrsqrt.pop %v1050
    %v1083 = vrsqrt.pop %v1051
    %v1084 = vrsqrt.pop %v1052
    %v1085 = vsub.f32 %v543, %v861
    %v1086 = vsub.f32 %v548, %v862
    %v1087 = vsub.f32 %v553, %v863
    %v1088 = vsub.f32 %v558, %v864
    %v1089 = vsub.f32 %v563, %v865
    %v1090 = vsub.f32 %v568, %v866
    %v1091 = vsub.f32 %v573, %v867
    %v1092 = vsub.f32 %v578, %v868
    %v1093 = vsub.f32 %v583, %v869
    %v1094 = vsub.f32 %v588, %v870
    %v1095 = vsub.f32 %v593, %v871
    %v1096 = vsub.f32 %v598, %v872
    %v1097 = vsub.f32 %v603, %v873
    %v1098 = vsub.f32 %v608, %v874
    %v1099 = vsub.f32 %v613, %v875
    %v1100 = vsub.f32 %v618, %v876
    %v1101 = vsub.f32 %v623, %v877
    %v1102 = vsub.f32 %v628, %v878
    %v1103 = vsub.f32 %v633, %v879
    %v1104 = vsub.f32 %v638, %v880
    %v1105 = vsub.f32 %v643, %v881
    %v1106 = vsub.f32 %v648, %v882
    %v1107 = vsub.f32 %v653, %v883
    %v1108 = vsub.f32 %v658, %v884
    %v1109 = vsub.f32 %v663, %v885
    %v1110 = vsub.f32 %v668, %v886
    %v1111 = vsub.f32 %v673, %v887
    %v1112 = vsub.f32 %v678, %v888
    %v1113 = vsub.f32 %v683, %v889
    %v1114 = vsub.f32 %v688, %v890
    %v1115 = vsub.f32 %v693, %v891
    %v1116 = vsub.f32 %v698, %v892
    %v1117 = vld [vmem:[#allocation7 + $0x1] sm:$0x1]
    %v1118 = vlaneseq
    %v1119 = vshrl.u32 %v1118, 7
    %v1120 = vsub.s32 0, %v1119
    %v1121 = vrot.slane %v1117, %v1120
    %v1122 = vmul.f32 %v1053, %v1121
    %v1123 = vmul.f32 %v1054, %v1121
    %v1124 = vmul.f32 %v1055, %v1121
    %v1125 = vmul.f32 %v1056, %v1121
    %v1126 = vmul.f32 %v1057, %v1121
    %v1127 = vmul.f32 %v1058, %v1121
    %v1128 = vmul.f32 %v1059, %v1121
    %v1129 = vmul.f32 %v1060, %v1121
    %v1130 = vmul.f32 %v1061, %v1121
    %v1131 = vmul.f32 %v1062, %v1121
    %v1132 = vmul.f32 %v1063, %v1121
    %v1133 = vmul.f32 %v1064, %v1121
    %v1134 = vmul.f32 %v1065, %v1121
    %v1135 = vmul.f32 %v1066, %v1121
    %v1136 = vmul.f32 %v1067, %v1121
    %v1137 = vmul.f32 %v1068, %v1121
    %v1138 = vmul.f32 %v1069, %v1121
    %v1139 = vmul.f32 %v1070, %v1121
    %v1140 = vmul.f32 %v1071, %v1121
    %v1141 = vmul.f32 %v1072, %v1121
    %v1142 = vmul.f32 %v1073, %v1121
    %v1143 = vmul.f32 %v1074, %v1121
    %v1144 = vmul.f32 %v1075, %v1121
    %v1145 = vmul.f32 %v1076, %v1121
    %v1146 = vmul.f32 %v1077, %v1121
    %v1147 = vmul.f32 %v1078, %v1121
    %v1148 = vmul.f32 %v1079, %v1121
    %v1149 = vmul.f32 %v1080, %v1121
    %v1150 = vmul.f32 %v1081, %v1121
    %v1151 = vmul.f32 %v1082, %v1121
    %v1152 = vmul.f32 %v1083, %v1121
    %v1153 = vmul.f32 %v1084, %v1121
    %v1154 = vmul.f32 %v1085, %v1122
    %v1155 = vmul.f32 %v1086, %v1123
    %v1156 = vmul.f32 %v1087, %v1124
    %v1157 = vmul.f32 %v1088, %v1125
    %v1158 = vmul.f32 %v1089, %v1126
    %v1159 = vmul.f32 %v1090, %v1127
    %v1160 = vmul.f32 %v1091, %v1128
    %v1161 = vmul.f32 %v1092, %v1129
    %v1162 = vmul.f32 %v1093, %v1130
    %v1163 = vmul.f32 %v1094, %v1131
    %v1164 = vmul.f32 %v1095, %v1132
    %v1165 = vmul.f32 %v1096, %v1133
    %v1166 = vmul.f32 %v1097, %v1134
    %v1167 = vmul.f32 %v1098, %v1135
    %v1168 = vmul.f32 %v1099, %v1136
    %v1169 = vmul.f32 %v1100, %v1137
    %v1170 = vmul.f32 %v1101, %v1138
    %v1171 = vmul.f32 %v1102, %v1139
    %v1172 = vmul.f32 %v1103, %v1140
    %v1173 = vmul.f32 %v1104, %v1141
    %v1174 = vmul.f32 %v1105, %v1142
    %v1175 = vmul.f32 %v1106, %v1143
    %v1176 = vmul.f32 %v1107, %v1144
    %v1177 = vmul.f32 %v1108, %v1145
    %v1178 = vmul.f32 %v1109, %v1146
    %v1179 = vmul.f32 %v1110, %v1147
    %v1180 = vmul.f32 %v1111, %v1148
    %v1181 = vmul.f32 %v1112, %v1149
    %v1182 = vmul.f32 %v1113, %v1150
    %v1183 = vmul.f32 %v1114, %v1151
    %v1184 = vmul.f32 %v1115, %v1152
    %v1185 = vmul.f32 %v1116, %v1153
    %v1186 = vld [vmem:[#allocation7 + $0x2] sm:$0x1]
    %v1187 = vlaneseq
    %v1188 = vshrl.u32 %v1187, 7
    %v1189 = vsub.s32 0, %v1188
    %v1190 = vrot.slane %v1186, %v1189
    %v1191 = vadd.f32 %v1154, %v1190
    %v1192 = vadd.f32 %v1155, %v1190
    %v1193 = vadd.f32 %v1156, %v1190
    %v1194 = vadd.f32 %v1157, %v1190
    %v1195 = vadd.f32 %v1158, %v1190
    %v1196 = vadd.f32 %v1159, %v1190
    %v1197 = vadd.f32 %v1160, %v1190
    %v1198 = vadd.f32 %v1161, %v1190
    %v1199 = vadd.f32 %v1162, %v1190
    %v1200 = vadd.f32 %v1163, %v1190
    %v1201 = vadd.f32 %v1164, %v1190
    %v1202 = vadd.f32 %v1165, %v1190
    %v1203 = vadd.f32 %v1166, %v1190
    %v1204 = vadd.f32 %v1167, %v1190
    %v1205 = vadd.f32 %v1168, %v1190
    %v1206 = vadd.f32 %v1169, %v1190
    %v1207 = vadd.f32 %v1170, %v1190
    %v1208 = vadd.f32 %v1171, %v1190
    %v1209 = vadd.f32 %v1172, %v1190
    %v1210 = vadd.f32 %v1173, %v1190
    %v1211 = vadd.f32 %v1174, %v1190
    %v1212 = vadd.f32 %v1175, %v1190
    %v1213 = vadd.f32 %v1176, %v1190
    %v1214 = vadd.f32 %v1177, %v1190
    %v1215 = vadd.f32 %v1178, %v1190
    %v1216 = vadd.f32 %v1179, %v1190
    %v1217 = vadd.f32 %v1180, %v1190
    %v1218 = vadd.f32 %v1181, %v1190
    %v1219 = vadd.f32 %v1182, %v1190
    %v1220 = vadd.f32 %v1183, %v1190
    %v1221 = vadd.f32 %v1184, %v1190
    %v1222 = vadd.f32 %v1185, %v1190
    %1223 = vst [vmem:[#allocation8] sm:$0xff] %v1191
    %1224 = vst [vmem:[#allocation8 + $0x8] sm:$0xff] %v1192
    %1225 = vst [vmem:[#allocation8 + $0x10] sm:$0xff] %v1193
    %1226 = vst [vmem:[#allocation8 + $0x18] sm:$0xff] %v1194
    %1227 = vst [vmem:[#allocation8 + $0x20] sm:$0xff] %v1195
    %1228 = vst [vmem:[#allocation8 + $0x28] sm:$0xff] %v1196
    %1229 = vst [vmem:[#allocation8 + $0x30] sm:$0xff] %v1197
    %1230 = vst [vmem:[#allocation8 + $0x38] sm:$0xff] %v1198
    %1231 = vst [vmem:[#allocation8 + $0x40] sm:$0xff] %v1199
    %1232 = vst [vmem:[#allocation8 + $0x48] sm:$0xff] %v1200
    %1233 = vst [vmem:[#allocation8 + $0x50] sm:$0xff] %v1201
    %1234 = vst [vmem:[#allocation8 + $0x58] sm:$0xff] %v1202
    %1235 = vst [vmem:[#allocation8 + $0x60] sm:$0xff] %v1203
    %1236 = vst [vmem:[#allocation8 + $0x68] sm:$0xff] %v1204
    %1237 = vst [vmem:[#allocation8 + $0x70] sm:$0xff] %v1205
    %1238 = vst [vmem:[#allocation8 + $0x78] sm:$0xff] %v1206
    %1239 = vst [vmem:[#allocation8 + $0x80] sm:$0xff] %v1207
    %1240 = vst [vmem:[#allocation8 + $0x88] sm:$0xff] %v1208
    %1241 = vst [vmem:[#allocation8 + $0x90] sm:$0xff] %v1209
    %1242 = vst [vmem:[#allocation8 + $0x98] sm:$0xff] %v1210
    %1243 = vst [vmem:[#allocation8 + $0xa0] sm:$0xff] %v1211
    %1244 = vst [vmem:[#allocation8 + $0xa8] sm:$0xff] %v1212
    %1245 = vst [vmem:[#allocation8 + $0xb0] sm:$0xff] %v1213
    %1246 = vst [vmem:[#allocation8 + $0xb8] sm:$0xff] %v1214
    %1247 = vst [vmem:[#allocation8 + $0xc0] sm:$0xff] %v1215
    %1248 = vst [vmem:[#allocation8 + $0xc8] sm:$0xff] %v1216
    %1249 = vst [vmem:[#allocation8 + $0xd0] sm:$0xff] %v1217
    %1250 = vst [vmem:[#allocation8 + $0xd8] sm:$0xff] %v1218
    %1251 = vst [vmem:[#allocation8 + $0xe0] sm:$0xff] %v1219
    %1252 = vst [vmem:[#allocation8 + $0xe8] sm:$0xff] %v1220
    %1253 = vst [vmem:[#allocation8 + $0xf0] sm:$0xff] %v1221
    %1254 = vst [vmem:[#allocation8 + $0xf8] sm:$0xff] %v1222
    // Predicated region
    $region26: #{tpu_custom_call.1} parent=1 // pred_check
      _
    $region27: #{tpu_custom_call.1} parent=1 // pred_check_branch
      %1256 = sbr.rel (0) target = $region29
    $region28: #{tpu_custom_call.1} parent=1 // pred_region
      %s1258 = ssub.s32 4096, 4096
      %1259 = vsyncadd [#allocation4], %s1258
      %s1260 = sshll.u32 [#allocation8], 4
      %s1261 = int_to_ptr.vmem [resolvable:$true] %s1260
      %1266 = dma.vmem_to_hbm [thread:$0]  %s1261, 4096, %s3, [#allocation4], 128, 128, 8
    $region29: #{tpu_custom_call.1} parent=1 // pred_fallthru
      _
    // Predicated region
    $region30: #{tpu_custom_call.1} parent=1 // pred_check
      _
    $region31: #{tpu_custom_call.1} parent=1 // pred_check_branch
      %1268 = sbr.rel (0) target = $region33
    $region32: #{tpu_custom_call.1} parent=1 // pred_region
      %1269 = dma.done [#allocation4], 4096
    $region33: #{tpu_custom_call.1} parent=1 // pred_fallthru
      _
    %1270 = vsyncpa [#allocation3], 1
    %1271 = vsyncpa [#allocation6], 1
    %1272 = vsyncpa [#allocation4], 1

</llo_original>
